<compile_context>
chip_gen: v7x
topology: tpu7x:2x2x1
jax: 0.10.0
libtpu: 0.0.40
codegen_flags: <defaults>
</compile_context>

<pallas_src>
import jax
import jax.numpy as jnp
from jax.experimental import pallas as pl
from jax.experimental.pallas import tpu as pltpu


def _residual_kernel(x_ref, w1_ref, b1_ref, w2_ref, b2_ref, o_ref):
    # Load the activation tile once; keep an f32 copy for the residual add and
    # feed bf16 inputs to the MXU (f32 accumulation via preferred_element_type).
    x_f32 = x_ref[...].astype(jnp.float32)
    x_bf16 = x_f32.astype(jnp.bfloat16)

    # lin1 + bias + ReLU (bias broadcast / ReLU in f32 on the VPU).
    h = jnp.dot(x_bf16, w1_ref[...], preferred_element_type=jnp.float32)
    h = jnp.maximum(h + b1_ref[...], 0.0)

    # lin2 + bias + ReLU.
    y = jnp.dot(h.astype(jnp.bfloat16), w2_ref[...],
                preferred_element_type=jnp.float32)
    y = jnp.maximum(y + b2_ref[...], 0.0)

    # Residual add in f32, single cast to the output dtype.
    o_ref[...] = (y + x_f32).astype(o_ref.dtype)


def _vmem_capacity_bytes():
    """Per-TensorCore VMEM capacity; conservative (v7x) fallback if unknown."""
    try:
        cap = int(pltpu.get_tpu_info().vmem_capacity_bytes)
        if cap > 0:
            return cap
    except Exception:
        pass
    return 64 << 20  # v7x has the smallest VMEM of the targeted generations.


def _pick_batch_tile(B, target, max_tb_by_vmem):
    """Largest multiple-of-8 divisor of B that is <= min(target, vmem cap).

    Never pads: if no such divisor exists, fall back to a single full-B tile
    (block_shape equal to the full dim is always legal).
    """
    target = max(8, min(target, max_tb_by_vmem))
    if B <= target:
        return B
    tb = (target // 8) * 8
    while tb >= 8:
        if B % tb == 0:
            return tb
        tb -= 8
    return B  # no clean divisor; one full tile, still no pad/slice.


def residual_layer(x, w1, b1, w2, b2, *, block_b=512):
    """x: [B, D] f32; w1, w2: [D, D] (stored [in, out]); b1, b2: [D].

    Pass w1/w2 already cast to bf16 (done once at parameter-init time) to avoid
    a per-call HBM pass over the weights; f32 weights are accepted and cast.
    """
    B, D = x.shape
    assert w1.shape == (D, D) and w2.shape == (D, D), "residual needs in_dim == out_dim"

    # Weights held resident in VMEM as bf16 (matmuls accumulate in f32).
    # These casts are no-ops when the caller already hoisted them to init time.
    w1_bf = w1 if w1.dtype == jnp.bfloat16 else w1.astype(jnp.bfloat16)
    w2_bf = w2 if w2.dtype == jnp.bfloat16 else w2.astype(jnp.bfloat16)
    b1_2d = b1.reshape(1, D).astype(jnp.float32)
    b2_2d = b2.reshape(1, D).astype(jnp.float32)

    # --- VMEM budget (per grid step) -------------------------------------
    # Resident weights (conservatively assume double-buffered) + padded biases.
    resident_bytes = 2 * (2 * D * D * 2) + 2 * 2 * 8 * max(D, 128) * 4
    # Per-row bytes: double-buffered f32 x tile + double-buffered f32 out tile
    # + live intermediates (x_f32, x_bf16, h, h_bf16, y).
    per_row_bytes = 2 * D * 4 + 2 * D * 4 + D * (4 + 2 + 4 + 2 + 4)

    vmem_cap = _vmem_capacity_bytes()
    vmem_ceiling = int(vmem_cap * 0.9)
    # Size the tile against roughly half the ceiling to leave headroom for
    # compiler-internal scratch; a single TensorCore's budget, not the chip's.
    max_tb_by_vmem = max(8, ((vmem_ceiling // 2 - resident_bytes) // per_row_bytes) // 8 * 8)

    # Keep >= 2 grid steps for realistic B so the "parallel" batch axis can
    # shard across v7x's two TensorCores.
    target_tb = block_b
    if B >= 16:
        half = -(-B // 2)            # cdiv(B, 2)
        half = -(-half // 8) * 8     # round up to a multiple of 8
        target_tb = min(target_tb, half)

    tb = _pick_batch_tile(B, target_tb, max_tb_by_vmem)
    grid = (B // tb,) if B % tb == 0 else (1,)
    assert B % tb == 0 or tb == B

    vmem_estimate = resident_bytes + tb * per_row_bytes
    vmem_limit = int(min(max(int(vmem_estimate * 1.5), 8 << 20), vmem_ceiling))

    cost = pl.CostEstimate(
        flops=4 * B * D * D,           # two [tb,D] @ [D,D] matmuls per tile
        transcendentals=0,
        bytes_accessed=(B * D * 4 + B * D * 4          # x in + out (f32)
                        + 2 * D * D * 2 + 2 * D * 4),  # bf16 weights + biases
    )

    # TODO(synk): if D grows large enough that 2*D*D bf16 weights stop fitting
    # v7x's 64 MiB VMEM, add an output-feature (N) grid axis for the weights.
    out = pl.pallas_call(
        _residual_kernel,
        out_shape=jax.ShapeDtypeStruct((B, D), x.dtype),
        grid_spec=pltpu.PrefetchScalarGridSpec(
            num_scalar_prefetch=0,
            grid=grid,
            in_specs=[
                pl.BlockSpec((tb, D), lambda i: (i, 0)),   # x: tiled over batch
                pl.BlockSpec((D, D), lambda i: (0, 0)),    # w1: resident
                pl.BlockSpec((1, D), lambda i: (0, 0)),    # b1: resident
                pl.BlockSpec((D, D), lambda i: (0, 0)),    # w2: resident
                pl.BlockSpec((1, D), lambda i: (0, 0)),    # b2: resident
            ],
            out_specs=pl.BlockSpec((tb, D), lambda i: (i, 0)),
        ),
        compiler_params=pltpu.CompilerParams(
            dimension_semantics=("parallel",),
            vmem_limit_bytes=vmem_limit,
        ),
        cost_estimate=cost,
    )(x, w1_bf, b1_2d, w2_bf, b2_2d)

    return out


if __name__ == "__main__":
    # Enough rows for a real batch grid (2 tiles of 512 on all generations).
    # in_dim == out_dim is required by the residual connection.
    B, D = 1024, 128

    key = jax.random.PRNGKey(0)
    kx, kw1, kb1, kw2, kb2 = jax.random.split(key, 5)

    # Deterministic init mimicking nn.Linear's uniform(-1/sqrt(fan_in), 1/sqrt(fan_in)).
    bound = 1.0 / jnp.sqrt(jnp.float32(D))
    x = jax.random.normal(kx, (B, D), dtype=jnp.float32)
    w1 = jax.random.uniform(kw1, (D, D), jnp.float32, -bound, bound)  # [in, out]
    b1 = jax.random.uniform(kb1, (D,), jnp.float32, -bound, bound)
    w2 = jax.random.uniform(kw2, (D, D), jnp.float32, -bound, bound)
    b2 = jax.random.uniform(kb2, (D,), jnp.float32, -bound, bound)

    # Parameter-init-time weight cast (hoisted out of the per-call wrapper).
    w1_bf = w1.astype(jnp.bfloat16)
    w2_bf = w2.astype(jnp.bfloat16)

    out = residual_layer(x, w1_bf, b1, w2_bf, b2)
    out = jax.block_until_ready(out)

    # Pure-JAX f32 reference (kernel feeds bf16 to the MXU -> looser tolerance).
    ref = jnp.maximum(jnp.maximum(x @ w1 + b1, 0.0) @ w2 + b2, 0.0) + x
    assert out.shape == (B, D)
    assert jnp.allclose(out, ref, atol=3e-2, rtol=3e-2), "mismatch vs f32 reference"

    print("KERNEL_OK")
</pallas_src>

<mosaic_0001>
module attributes {stable_mosaic.version = 11 : i64} {
  func.func @_residual_kernel(%arg0: i32, %arg1: memref<512x128xf32, #tpu.memory_space<vmem>>, %arg2: memref<128x128xbf16, #tpu.memory_space<vmem>>, %arg3: memref<1x128xf32, #tpu.memory_space<vmem>>, %arg4: memref<128x128xbf16, #tpu.memory_space<vmem>>, %arg5: memref<1x128xf32, #tpu.memory_space<vmem>>, %arg6: memref<512x128xf32, #tpu.memory_space<vmem>>) attributes {dimension_semantics = [#tpu.dimension_semantics<parallel>], iteration_bounds = array<i64: 2>, scalar_prefetch = 0 : i64, scratch_operands = 0 : i64, tpu.core_type = #tpu.core_type<tc>, window_params = [{transform_indices = @transform_0, window_bounds = array<i64: 512, 128>}, {pipeline_mode = #tpu.pipeline_mode<synchronous>, transform_indices = @transform_1, window_bounds = array<i64: 128, 128>}, {pipeline_mode = #tpu.pipeline_mode<synchronous>, transform_indices = @transform_2, window_bounds = array<i64: 1, 128>}, {pipeline_mode = #tpu.pipeline_mode<synchronous>, transform_indices = @transform_3, window_bounds = array<i64: 128, 128>}, {pipeline_mode = #tpu.pipeline_mode<synchronous>, transform_indices = @transform_4, window_bounds = array<i64: 1, 128>}, {transform_indices = @transform_5, window_bounds = array<i64: 512, 128>}]} {
    %c0 = arith.constant 0 : index
    %c0_0 = arith.constant 0 : index
    %0 = vector.load %arg1[%c0, %c0_0] : memref<512x128xf32, #tpu.memory_space<vmem>>, vector<512x128xf32>
    %1 = arith.truncf %0 : vector<512x128xf32> to vector<512x128xbf16>
    %c0_1 = arith.constant 0 : index
    %c0_2 = arith.constant 0 : index
    %2 = vector.load %arg2[%c0_1, %c0_2] : memref<128x128xbf16, #tpu.memory_space<vmem>>, vector<128x128xbf16>
    %cst = arith.constant dense<0.000000e+00> : vector<512x128xf32>
    %3 = tpu.matmul %1, %2, %cst {dimension_numbers = #tpu.dot_dimension_numbers<[1], [0], [0], [1], [0, 0, 1, 1], [], []>} : vector<512x128xbf16>, vector<128x128xbf16>, vector<512x128xf32> -> vector<512x128xf32>
    %c0_3 = arith.constant 0 : index
    %c0_4 = arith.constant 0 : index
    %4 = vector.load %arg3[%c0_3, %c0_4] : memref<1x128xf32, #tpu.memory_space<vmem>>, vector<1x128xf32>
    %5 = vector.broadcast %4 : vector<1x128xf32> to vector<512x128xf32>
    %6 = arith.addf %3, %5 : vector<512x128xf32>
    %cst_5 = arith.constant 0.000000e+00 : f32
    %7 = vector.broadcast %cst_5 : f32 to vector<512x128xf32>
    %8 = arith.maximumf %6, %7 : vector<512x128xf32>
    %9 = arith.truncf %8 : vector<512x128xf32> to vector<512x128xbf16>
    %c0_6 = arith.constant 0 : index
    %c0_7 = arith.constant 0 : index
    %10 = vector.load %arg4[%c0_6, %c0_7] : memref<128x128xbf16, #tpu.memory_space<vmem>>, vector<128x128xbf16>
    %cst_8 = arith.constant dense<0.000000e+00> : vector<512x128xf32>
    %11 = tpu.matmul %9, %10, %cst_8 {dimension_numbers = #tpu.dot_dimension_numbers<[1], [0], [0], [1], [0, 0, 1, 1], [], []>} : vector<512x128xbf16>, vector<128x128xbf16>, vector<512x128xf32> -> vector<512x128xf32>
    %c0_9 = arith.constant 0 : index
    %c0_10 = arith.constant 0 : index
    %12 = vector.load %arg5[%c0_9, %c0_10] : memref<1x128xf32, #tpu.memory_space<vmem>>, vector<1x128xf32>
    %13 = vector.broadcast %12 : vector<1x128xf32> to vector<512x128xf32>
    %14 = arith.addf %11, %13 : vector<512x128xf32>
    %cst_11 = arith.constant 0.000000e+00 : f32
    %15 = vector.broadcast %cst_11 : f32 to vector<512x128xf32>
    %16 = arith.maximumf %14, %15 : vector<512x128xf32>
    %17 = arith.addf %16, %0 : vector<512x128xf32>
    %c0_12 = arith.constant 0 : index
    %c0_13 = arith.constant 0 : index
    %18 = vector.load %arg6[%c0_12, %c0_13] : memref<512x128xf32, #tpu.memory_space<vmem>>, vector<512x128xf32>
    tpu.vector_store %arg6[%c0_12, %c0_13], %17 {strides = array<i32>} : memref<512x128xf32, #tpu.memory_space<vmem>>, vector<512x128xf32>,
    return
  }
  func.func @transform_0(%arg0: i32) -> (i32, i32) {
    %c0_i32 = arith.constant 0 : i32
    %c0_i32_0 = arith.constant 0 : i32
    return %arg0, %c0_i32 : i32, i32
  }
  func.func @transform_1(%arg0: i32) -> (i32, i32) {
    %c0_i32 = arith.constant 0 : i32
    %c0_i32_0 = arith.constant 0 : i32
    %c0_i32_1 = arith.constant 0 : i32
    return %c0_i32, %c0_i32_0 : i32, i32
  }
  func.func @transform_2(%arg0: i32) -> (i32, i32) {
    %c0_i32 = arith.constant 0 : i32
    %c0_i32_0 = arith.constant 0 : i32
    %c0_i32_1 = arith.constant 0 : i32
    return %c0_i32, %c0_i32_0 : i32, i32
  }
  func.func @transform_3(%arg0: i32) -> (i32, i32) {
    %c0_i32 = arith.constant 0 : i32
    %c0_i32_0 = arith.constant 0 : i32
    %c0_i32_1 = arith.constant 0 : i32
    return %c0_i32, %c0_i32_0 : i32, i32
  }
  func.func @transform_4(%arg0: i32) -> (i32, i32) {
    %c0_i32 = arith.constant 0 : i32
    %c0_i32_0 = arith.constant 0 : i32
    %c0_i32_1 = arith.constant 0 : i32
    return %c0_i32, %c0_i32_0 : i32, i32
  }
  func.func @transform_5(%arg0: i32) -> (i32, i32) {
    %c0_i32 = arith.constant 0 : i32
    %c0_i32_0 = arith.constant 0 : i32
    return %arg0, %c0_i32 : i32, i32
  }
}

</mosaic_0001>

<llo_original>
// kernel: tpu_custom_call.1
$region0: #{tpu_custom_call.1}
  #allocation0 [shape = 'u32[]', space=smem, size = 0x4, offset = 0x4, fixed_abs, tag = 'smem constant byte address 0x4 - core index']
  #allocation1 [shape = 'u32[144,128]{1,0:T(1,128)}', space=vmem, size = 0x12000, scoped, tag = 'internal scratch']
  %s0 = inlined_call_operand.hbm [shape: f32[1024,128], index: 0, kind: input, shape index: {}]
  %s1 = inlined_call_operand.hbm [shape: bf16[128,128], index: 1, kind: input, shape index: {}]
  %s2 = inlined_call_operand.vmem [shape: f32[1,128], index: 2, kind: input, shape index: {}]
  %s3 = inlined_call_operand.hbm [shape: bf16[128,128], index: 3, kind: input, shape index: {}]
  %s4 = inlined_call_operand.vmem [shape: f32[1,128], index: 4, kind: input, shape index: {}]
  %s5 = inlined_call_operand.hbm [shape: f32[1024,128], index: 5, kind: output, shape index: {}]
  %s6 = sld [smem:[#allocation0]]
  $region65: #{tpu_custom_call.1} parent=0
    _
  %s8 = ssub.s32 1, %s6
  %s9 = scalar_select 0, %s8, %s6
  $region1: #{tpu_custom_call.1} parent=0
    #allocation2 [shape = 'u8[524288]{0}', space=vmem, size = 0x80000, scoped, tag = 'input window, operand 0']
    #allocation3 [shape = 's32[2]{0}', space=sflag, size = 0x8, scoped, tag = 'scoped memory for tpu_custom_call.1']
    #allocation4 [shape = 's32[2]{0}', space=sflag, size = 0x8, scoped, tag = 'scoped memory for tpu_custom_call.1']
    #allocation5 [shape = 'u8[32768]{0}', space=vmem, size = 0x8000, scoped, tag = 'input window, operand 1, single buffered']
    #allocation6 [shape = 's32[1]{0}', space=sflag, size = 0x4, scoped, tag = 'scoped memory for tpu_custom_call.1']
    #allocation7 [shape = 'u8[32768]{0}', space=vmem, size = 0x8000, scoped, tag = 'input window, operand 3, single buffered']
    #allocation8 [shape = 'u8[524288]{0}', space=vmem, size = 0x80000, scoped, tag = 'output window, operand 0']
    %10 = vsyncpa [#allocation3], 0
    %s11 = scalar_lea.sflag [#allocation3], 1
    %12 = vsyncpa %s11, 0
    %13 = vsyncpa [#allocation6], 0
    %14 = vsyncpa [#allocation4], 0
    %s15 = scalar_lea.sflag [#allocation4], 1
    %16 = vsyncpa %s15, 0
    loop: start=0, step=1, limit=4
    $region2: #{tpu_custom_call.1} parent=1 // loop_pre_header
      _
    $region3: #{tpu_custom_call.1} parent=1 // loop_header
      %s18 = sphi 0, %s22
      %p19 = scmp.ge.s32.totalorder %s18, 4
      %s28 = sphi 0, %s30
      %s31 = sphi 0, %s28
      %s32 = sphi 0, %s31
      %s48 = sphi 0, %s32
      %s52 = sphi 0, %s52
      %s54 = sphi 0, %s52
      %s55 = sphi 0, %s54
      %s69 = sphi 0, %s55
      %s73 = sphi 0, %s73
      %s75 = sphi 0, %s73
      %s76 = sphi 0, %s75
      %s90 = sphi 0, %s76
      %s94 = sphi 0, %s94
      %s96 = sphi 0, %s94
      %s97 = sphi 0, %s96
      %s111 = sphi 0, %s97
      %s115 = sphi 0, %s115
      %s117 = sphi 0, %s115
      %s118 = sphi 0, %s117
      %s132 = sphi 0, %s118
      %s138 = sphi 0, %s140
      %s141 = sphi 0, %s138
      %s142 = sphi 0, %s141
      %s158 = sphi 0, %s142
    $region4: #{tpu_custom_call.1} parent=1 // loop_header_branch
      %21 = sbr.rel (%p19) target = $region8
    $region5: #{tpu_custom_call.1} parent=1 // loop_body
      %s23 = ssub.s32 %s18, 1
      %s24 = ssub.s32 %s18, 2
      %s25 = sadd.s32 %s18, 1
      %s26 = ssub.s32 %s18, %s25
      %p27 = scmp.eq.s32.totalorder %s26, 0
      %s29 = sadd.s32 %s28, 1
      %s30 = scalar_select %p27, %s28, %s29
      %p33 = pneg %p27
      %p34 = scmp.eq.s32.totalorder %s18, 1
      %p35 = por %p33, %p34
      %p36 = scmp.ne.s32.totalorder %s28, %s31
      %p37 = scmp.eq.s32.totalorder %s18, 0
      %p38 = por %p36, %p37
      %p39 = scmp.ne.s32.totalorder %s28, %s31
      %p40 = scmp.eq.s32.totalorder %s23, 1
      %p41 = por %p39, %p40
      %p42 = scmp.ne.s32.totalorder %s31, %s32
      %p43 = scmp.eq.s32.totalorder %s23, 0
      %p44 = por %p42, %p43
      %p45 = scmp.ne.s32.totalorder %s31, %s32
      %p46 = scmp.eq.s32.totalorder %s24, 1
      %p47 = por %p45, %p46
      %p49 = scmp.ne.s32.totalorder %s32, %s48
      %p50 = scmp.eq.s32.totalorder %s24, 0
      %p51 = por %p49, %p50
      %s53 = sadd.s32 %s52, 1
      %p56 = scmp.eq.s32.totalorder %s18, 1
      %p57 = scmp.ne.s32.totalorder %s52, %s54
      %p58 = scmp.eq.s32.totalorder %s18, 0
      %p59 = por %p57, %p58
      %p60 = scmp.ne.s32.totalorder %s52, %s54
      %p61 = scmp.eq.s32.totalorder %s23, 1
      %p62 = por %p60, %p61
      %p63 = scmp.ne.s32.totalorder %s54, %s55
      %p64 = scmp.eq.s32.totalorder %s23, 0
      %p65 = por %p63, %p64
      %p66 = scmp.ne.s32.totalorder %s54, %s55
      %p67 = scmp.eq.s32.totalorder %s24, 1
      %p68 = por %p66, %p67
      %p70 = scmp.ne.s32.totalorder %s55, %s69
      %p71 = scmp.eq.s32.totalorder %s24, 0
      %p72 = por %p70, %p71
      %s74 = sadd.s32 %s73, 1
      %p77 = scmp.eq.s32.totalorder %s18, 1
      %p78 = scmp.ne.s32.totalorder %s73, %s75
      %p79 = scmp.eq.s32.totalorder %s18, 0
      %p80 = por %p78, %p79
      %p81 = scmp.ne.s32.totalorder %s73, %s75
      %p82 = scmp.eq.s32.totalorder %s23, 1
      %p83 = por %p81, %p82
      %p84 = scmp.ne.s32.totalorder %s75, %s76
      %p85 = scmp.eq.s32.totalorder %s23, 0
      %p86 = por %p84, %p85
      %p87 = scmp.ne.s32.totalorder %s75, %s76
      %p88 = scmp.eq.s32.totalorder %s24, 1
      %p89 = por %p87, %p88
      %p91 = scmp.ne.s32.totalorder %s76, %s90
      %p92 = scmp.eq.s32.totalorder %s24, 0
      %p93 = por %p91, %p92
      %s95 = sadd.s32 %s94, 1
      %p98 = scmp.eq.s32.totalorder %s18, 1
      %p99 = scmp.ne.s32.totalorder %s94, %s96
      %p100 = scmp.eq.s32.totalorder %s18, 0
      %p101 = por %p99, %p100
      %p102 = scmp.ne.s32.totalorder %s94, %s96
      %p103 = scmp.eq.s32.totalorder %s23, 1
      %p104 = por %p102, %p103
      %p105 = scmp.ne.s32.totalorder %s96, %s97
      %p106 = scmp.eq.s32.totalorder %s23, 0
      %p107 = por %p105, %p106
      %p108 = scmp.ne.s32.totalorder %s96, %s97
      %p109 = scmp.eq.s32.totalorder %s24, 1
      %p110 = por %p108, %p109
      %p112 = scmp.ne.s32.totalorder %s97, %s111
      %p113 = scmp.eq.s32.totalorder %s24, 0
      %p114 = por %p112, %p113
      %s116 = sadd.s32 %s115, 1
      %p119 = scmp.eq.s32.totalorder %s18, 1
      %p120 = scmp.ne.s32.totalorder %s115, %s117
      %p121 = scmp.eq.s32.totalorder %s18, 0
      %p122 = por %p120, %p121
      %p123 = scmp.ne.s32.totalorder %s115, %s117
      %p124 = scmp.eq.s32.totalorder %s23, 1
      %p125 = por %p123, %p124
      %p126 = scmp.ne.s32.totalorder %s117, %s118
      %p127 = scmp.eq.s32.totalorder %s23, 0
      %p128 = por %p126, %p127
      %p129 = scmp.ne.s32.totalorder %s117, %s118
      %p130 = scmp.eq.s32.totalorder %s24, 1
      %p131 = por %p129, %p130
      %p133 = scmp.ne.s32.totalorder %s118, %s132
      %p134 = scmp.eq.s32.totalorder %s24, 0
      %p135 = por %p133, %p134
      %s136 = ssub.s32 %s18, %s25
      %p137 = scmp.eq.s32.totalorder %s136, 0
      %s139 = sadd.s32 %s138, 1
      %s140 = scalar_select %p137, %s138, %s139
      %p143 = pneg %p137
      %p144 = scmp.eq.s32.totalorder %s18, 1
      %p145 = por %p143, %p144
      %p146 = scmp.ne.s32.totalorder %s138, %s141
      %p147 = scmp.eq.s32.totalorder %s18, 0
      %p148 = por %p146, %p147
      %p149 = scmp.ne.s32.totalorder %s138, %s141
      %p150 = scmp.eq.s32.totalorder %s23, 1
      %p151 = por %p149, %p150
      %p152 = scmp.ne.s32.totalorder %s141, %s142
      %p153 = scmp.eq.s32.totalorder %s23, 0
      %p154 = por %p152, %p153
      %p155 = scmp.ne.s32.totalorder %s141, %s142
      %p156 = scmp.eq.s32.totalorder %s24, 1
      %p157 = por %p155, %p156
      %p159 = scmp.ne.s32.totalorder %s142, %s158
      %p160 = scmp.eq.s32.totalorder %s24, 0
      %p161 = por %p159, %p160
      %p162 = scmp.le.s32.totalorder 1, %s18
      %p163 = scmp.lt.s32.totalorder %s18, 3
      %p164 = pnand %p162, %p163
      %p165 = pneg %p164
      // Predicated region
      $region9: #{tpu_custom_call.1} parent=5 // pred_check
        _
      $region10: #{tpu_custom_call.1} parent=5 // pred_check_branch
        %167 = sbr.rel (%p164) target = $region12
      $region11: #{tpu_custom_call.1} parent=5 // pred_region
        %s168 = ssub.s32 %s18, 1
        // Predicated region
        $region13: #{tpu_custom_call.1} parent=11 // pred_check
          %p169 = pneg %p65
        $region14: #{tpu_custom_call.1} parent=11 // pred_check_branch
          %171 = sbr.rel (%p169) target = $region16
        $region15: #{tpu_custom_call.1} parent=11 // pred_region
          %s173 = ssub.s32 1024, 1024
          %174 = vsyncadd [#allocation6], %s173
          %s175 = sshll.u32 [#allocation5], 4
          %s176 = int_to_ptr.vmem [resolvable:$true] %s175
          %181 = dma.hbm_to_vmem [thread:$0]  %s1, 1024, %s176, [#allocation6], 64, 64, 4
        $region16: #{tpu_custom_call.1} parent=11 // pred_fallthru
          _
        // Predicated region
        $region17: #{tpu_custom_call.1} parent=11 // pred_check
          %p182 = pneg %p86
        $region18: #{tpu_custom_call.1} parent=11 // pred_check_branch
          %184 = sbr.rel (%p182) target = $region20
        $region19: #{tpu_custom_call.1} parent=11 // pred_region
          _
        $region20: #{tpu_custom_call.1} parent=11 // pred_fallthru
          _
        // Predicated region
        $region21: #{tpu_custom_call.1} parent=11 // pred_check
          %p185 = pneg %p107
        $region22: #{tpu_custom_call.1} parent=11 // pred_check_branch
          %187 = sbr.rel (%p185) target = $region24
        $region23: #{tpu_custom_call.1} parent=11 // pred_region
          %s189 = ssub.s32 1024, 1024
          %190 = vsyncadd [#allocation6], %s189
          %s191 = sshll.u32 [#allocation7], 4
          %s192 = int_to_ptr.vmem [resolvable:$true] %s191
          %197 = dma.hbm_to_vmem [thread:$0]  %s3, 1024, %s192, [#allocation6], 64, 64, 4
        $region24: #{tpu_custom_call.1} parent=11 // pred_fallthru
          _
        // Predicated region
        $region25: #{tpu_custom_call.1} parent=11 // pred_check
          %p198 = pneg %p128
        $region26: #{tpu_custom_call.1} parent=11 // pred_check_branch
          %200 = sbr.rel (%p198) target = $region28
        $region27: #{tpu_custom_call.1} parent=11 // pred_region
          _
        $region28: #{tpu_custom_call.1} parent=11 // pred_fallthru
          _
      $region12: #{tpu_custom_call.1} parent=5 // pred_fallthru
        _
      %p201 = scmp.lt.s32.totalorder %s18, 2
      // Predicated region
      $region29: #{tpu_custom_call.1} parent=5 // pred_check
        %p202 = pneg %p201
      $region30: #{tpu_custom_call.1} parent=5 // pred_check_branch
        %204 = sbr.rel (%p202) target = $region32
      $region31: #{tpu_custom_call.1} parent=5 // pred_region
        // Predicated region
        $region33: #{tpu_custom_call.1} parent=31 // pred_check
          %p205 = pneg %p38
        $region34: #{tpu_custom_call.1} parent=31 // pred_check_branch
          %207 = sbr.rel (%p205) target = $region36
        $region35: #{tpu_custom_call.1} parent=31 // pred_region
          %s208 = sand.u32 %s28, 1
          %s209 = scalar_lea.sflag [#allocation3], %s208
          %s210 = sand.u32 %s28, 1
          %s211 = smul.addr %s210, 512
          %s212 = scalar_lea.vmem [#allocation2], %s211
          %s213 = smul.u32 64, %s18
          %s215 = ssub.s32 8192, 8192
          %216 = vsyncadd %s209, %s215
          %s217 = smul.addr %s213, 128
          %s218 = scalar_lea.hbm %s0, %s217
          %s219 = sshll.u32 %s212, 4
          %s220 = int_to_ptr.vmem [resolvable:$true] %s219
          %225 = dma.hbm_to_vmem [thread:$0]  %s218, 8192, %s220, %s209, 128, 128, 8
        $region36: #{tpu_custom_call.1} parent=31 // pred_fallthru
          _
      $region32: #{tpu_custom_call.1} parent=5 // pred_fallthru
        _
      %p226 = scmp.le.s32.totalorder 1, %s18
      %p227 = scmp.lt.s32.totalorder %s18, 3
      %p228 = pnand %p226, %p227
      %p229 = pneg %p228
      // Predicated region
      $region37: #{tpu_custom_call.1} parent=5 // pred_check
        _
      $region38: #{tpu_custom_call.1} parent=5 // pred_check_branch
        %231 = sbr.rel (%p228) target = $region40
      $region39: #{tpu_custom_call.1} parent=5 // pred_region
        %s232 = ssub.s32 %s18, 1
        %s233 = sand.u32 %s31, 1
        %s234 = scalar_lea.sflag [#allocation3], %s233
        %s235 = sand.u32 %s31, 1
        %s236 = smul.addr %s235, 512
        %s237 = scalar_lea.vmem [#allocation2], %s236
        // Predicated region
        $region41: #{tpu_custom_call.1} parent=39 // pred_check
          %p238 = pneg %p44
        $region42: #{tpu_custom_call.1} parent=39 // pred_check_branch
          %240 = sbr.rel (%p238) target = $region44
        $region43: #{tpu_custom_call.1} parent=39 // pred_region
          %241 = dma.done %s234, 8192
        $region44: #{tpu_custom_call.1} parent=39 // pred_fallthru
          _
        // Predicated region
        $region45: #{tpu_custom_call.1} parent=39 // pred_check
          %p242 = pneg %p65
        $region46: #{tpu_custom_call.1} parent=39 // pred_check_branch
          %244 = sbr.rel (%p242) target = $region48
        $region47: #{tpu_custom_call.1} parent=39 // pred_region
          %245 = dma.done [#allocation6], 1024
        $region48: #{tpu_custom_call.1} parent=39 // pred_fallthru
          _
        // Predicated region
        $region49: #{tpu_custom_call.1} parent=39 // pred_check
          %p246 = pneg %p107
        $region50: #{tpu_custom_call.1} parent=39 // pred_check_branch
          %248 = sbr.rel (%p246) target = $region52
        $region51: #{tpu_custom_call.1} parent=39 // pred_region
          %249 = dma.done [#allocation6], 1024
        $region52: #{tpu_custom_call.1} parent=39 // pred_fallthru
          _
        %s250 = sand.u32 %s31, 1
        %s251 = scalar_lea.sflag [#allocation3], %s250
        %s252 = sand.u32 %s31, 1
        %s253 = smul.addr %s252, 512
        %s254 = scalar_lea.vmem [#allocation2], %s253
        %p255 = pneg %p44
        %p256 = pneg %p41
        %p257 = pneg %p65
        %p258 = pneg %p62
        %p259 = pneg %p86
        %p260 = pneg %p83
        %p261 = pneg %p107
        %p262 = pneg %p104
        %p263 = pneg %p128
        %p264 = pneg %p125
        %p265 = pneg %p154
        %p266 = pneg %p151
        %s267 = sand.u32 %s141, 1
        %s268 = scalar_lea.sflag [#allocation4], %s267
        %s269 = sand.u32 %s141, 1
        %s270 = smul.addr %s269, 512
        %s271 = scalar_lea.vmem [#allocation8], %s270
        %s272 = smul.u32 64, %s23
        %s273 = smul.u32 64, %s23
        %v275 = vld [vmem:[%s237] sm:$0xff]
        %v276 = vld [vmem:[%s237 + $0x8] sm:$0xff]
        %v277 = vld [vmem:[%s237 + $0x10] sm:$0xff]
        %v278 = vld [vmem:[%s237 + $0x18] sm:$0xff]
        %v279 = vld [vmem:[%s237 + $0x20] sm:$0xff]
        %v280 = vld [vmem:[%s237 + $0x28] sm:$0xff]
        %v281 = vld [vmem:[%s237 + $0x30] sm:$0xff]
        %v282 = vld [vmem:[%s237 + $0x38] sm:$0xff]
        %v283 = vld [vmem:[%s237 + $0x40] sm:$0xff]
        %v284 = vld [vmem:[%s237 + $0x48] sm:$0xff]
        %v285 = vld [vmem:[%s237 + $0x50] sm:$0xff]
        %v286 = vld [vmem:[%s237 + $0x58] sm:$0xff]
        %v287 = vld [vmem:[%s237 + $0x60] sm:$0xff]
        %v288 = vld [vmem:[%s237 + $0x68] sm:$0xff]
        %v289 = vld [vmem:[%s237 + $0x70] sm:$0xff]
        %v290 = vld [vmem:[%s237 + $0x78] sm:$0xff]
        %v291 = vld [vmem:[%s237 + $0x80] sm:$0xff]
        %v292 = vld [vmem:[%s237 + $0x88] sm:$0xff]
        %v293 = vld [vmem:[%s237 + $0x90] sm:$0xff]
        %v294 = vld [vmem:[%s237 + $0x98] sm:$0xff]
        %v295 = vld [vmem:[%s237 + $0xa0] sm:$0xff]
        %v296 = vld [vmem:[%s237 + $0xa8] sm:$0xff]
        %v297 = vld [vmem:[%s237 + $0xb0] sm:$0xff]
        %v298 = vld [vmem:[%s237 + $0xb8] sm:$0xff]
        %v299 = vld [vmem:[%s237 + $0xc0] sm:$0xff]
        %v300 = vld [vmem:[%s237 + $0xc8] sm:$0xff]
        %v301 = vld [vmem:[%s237 + $0xd0] sm:$0xff]
        %v302 = vld [vmem:[%s237 + $0xd8] sm:$0xff]
        %v303 = vld [vmem:[%s237 + $0xe0] sm:$0xff]
        %v304 = vld [vmem:[%s237 + $0xe8] sm:$0xff]
        %v305 = vld [vmem:[%s237 + $0xf0] sm:$0xff]
        %v306 = vld [vmem:[%s237 + $0xf8] sm:$0xff]
        %v307 = vld [vmem:[%s237 + $0x100] sm:$0xff]
        %v308 = vld [vmem:[%s237 + $0x108] sm:$0xff]
        %v309 = vld [vmem:[%s237 + $0x110] sm:$0xff]
        %v310 = vld [vmem:[%s237 + $0x118] sm:$0xff]
        %v311 = vld [vmem:[%s237 + $0x120] sm:$0xff]
        %v312 = vld [vmem:[%s237 + $0x128] sm:$0xff]
        %v313 = vld [vmem:[%s237 + $0x130] sm:$0xff]
        %v314 = vld [vmem:[%s237 + $0x138] sm:$0xff]
        %v315 = vld [vmem:[%s237 + $0x140] sm:$0xff]
        %v316 = vld [vmem:[%s237 + $0x148] sm:$0xff]
        %v317 = vld [vmem:[%s237 + $0x150] sm:$0xff]
        %v318 = vld [vmem:[%s237 + $0x158] sm:$0xff]
        %v319 = vld [vmem:[%s237 + $0x160] sm:$0xff]
        %v320 = vld [vmem:[%s237 + $0x168] sm:$0xff]
        %v321 = vld [vmem:[%s237 + $0x170] sm:$0xff]
        %v322 = vld [vmem:[%s237 + $0x178] sm:$0xff]
        %v323 = vld [vmem:[%s237 + $0x180] sm:$0xff]
        %v324 = vld [vmem:[%s237 + $0x188] sm:$0xff]
        %v325 = vld [vmem:[%s237 + $0x190] sm:$0xff]
        %v326 = vld [vmem:[%s237 + $0x198] sm:$0xff]
        %v327 = vld [vmem:[%s237 + $0x1a0] sm:$0xff]
        %v328 = vld [vmem:[%s237 + $0x1a8] sm:$0xff]
        %v329 = vld [vmem:[%s237 + $0x1b0] sm:$0xff]
        %v330 = vld [vmem:[%s237 + $0x1b8] sm:$0xff]
        %v331 = vld [vmem:[%s237 + $0x1c0] sm:$0xff]
        %v332 = vld [vmem:[%s237 + $0x1c8] sm:$0xff]
        %v333 = vld [vmem:[%s237 + $0x1d0] sm:$0xff]
        %v334 = vld [vmem:[%s237 + $0x1d8] sm:$0xff]
        %v335 = vld [vmem:[%s237 + $0x1e0] sm:$0xff]
        %v336 = vld [vmem:[%s237 + $0x1e8] sm:$0xff]
        %v337 = vld [vmem:[%s237 + $0x1f0] sm:$0xff]
        %v338 = vld [vmem:[%s237 + $0x1f8] sm:$0xff]
        %v339 = vpack.c.bf16 %v276, %v275
        %v340 = vpack.c.bf16 %v278, %v277
        %v341 = vpack.c.bf16 %v280, %v279
        %v342 = vpack.c.bf16 %v282, %v281
        %v343 = vpack.c.bf16 %v284, %v283
        %v344 = vpack.c.bf16 %v286, %v285
        %v345 = vpack.c.bf16 %v288, %v287
        %v346 = vpack.c.bf16 %v290, %v289
        %v347 = vpack.c.bf16 %v292, %v291
        %v348 = vpack.c.bf16 %v294, %v293
        %v349 = vpack.c.bf16 %v296, %v295
        %v350 = vpack.c.bf16 %v298, %v297
        %v351 = vpack.c.bf16 %v300, %v299
        %v352 = vpack.c.bf16 %v302, %v301
        %v353 = vpack.c.bf16 %v304, %v303
        %v354 = vpack.c.bf16 %v306, %v305
        %v355 = vpack.c.bf16 %v308, %v307
        %v356 = vpack.c.bf16 %v310, %v309
        %v357 = vpack.c.bf16 %v312, %v311
        %v358 = vpack.c.bf16 %v314, %v313
        %v359 = vpack.c.bf16 %v316, %v315
        %v360 = vpack.c.bf16 %v318, %v317
        %v361 = vpack.c.bf16 %v320, %v319
        %v362 = vpack.c.bf16 %v322, %v321
        %v363 = vpack.c.bf16 %v324, %v323
        %v364 = vpack.c.bf16 %v326, %v325
        %v365 = vpack.c.bf16 %v328, %v327
        %v366 = vpack.c.bf16 %v330, %v329
        %v367 = vpack.c.bf16 %v332, %v331
        %v368 = vpack.c.bf16 %v334, %v333
        %v369 = vpack.c.bf16 %v336, %v335
        %v370 = vpack.c.bf16 %v338, %v337
        %v371 = vld [vmem:[#allocation5] sm:$0xf]
        %v372 = vld [vmem:[#allocation5 + $0x4] sm:$0xf]
        %v373 = vld [vmem:[#allocation5 + $0x8] sm:$0xf]
        %v374 = vld [vmem:[#allocation5 + $0xc] sm:$0xf]
        %v375 = vld [vmem:[#allocation5 + $0x10] sm:$0xf]
        %v376 = vld [vmem:[#allocation5 + $0x14] sm:$0xf]
        %v377 = vld [vmem:[#allocation5 + $0x18] sm:$0xf]
        %v378 = vld [vmem:[#allocation5 + $0x1c] sm:$0xf]
        %v379 = vld [vmem:[#allocation5 + $0x20] sm:$0xf]
        %v380 = vld [vmem:[#allocation5 + $0x24] sm:$0xf]
        %v381 = vld [vmem:[#allocation5 + $0x28] sm:$0xf]
        %v382 = vld [vmem:[#allocation5 + $0x2c] sm:$0xf]
        %v383 = vld [vmem:[#allocation5 + $0x30] sm:$0xf]
        %v384 = vld [vmem:[#allocation5 + $0x34] sm:$0xf]
        %v385 = vld [vmem:[#allocation5 + $0x38] sm:$0xf]
        %v386 = vld [vmem:[#allocation5 + $0x3c] sm:$0xf]
        %v387 = vld [vmem:[%s2] sm:$0x1]
        %v389 = vlaneseq
        %v390 = vshrl.u32 %v389, 7
        %v391 = vsub.s32 0, %v390
        %v392 = vrot.slane %v387, %v391
        %v410 = vunpack.c.l.b16 %v371
        %v411 = vunpack.c.l.b16 %v372
        %v412 = vunpack.c.l.b16 %v373
        %v413 = vunpack.c.l.b16 %v374
        %v414 = vunpack.c.l.b16 %v375
        %v415 = vunpack.c.l.b16 %v376
        %v416 = vunpack.c.l.b16 %v377
        %v417 = vunpack.c.l.b16 %v378
        %v418 = vunpack.c.l.b16 %v379
        %v419 = vunpack.c.l.b16 %v380
        %v420 = vunpack.c.l.b16 %v381
        %v421 = vunpack.c.l.b16 %v382
        %v422 = vunpack.c.l.b16 %v383
        %v423 = vunpack.c.l.b16 %v384
        %v424 = vunpack.c.l.b16 %v385
        %v425 = vunpack.c.l.b16 %v386
        %v426 = vpack.c.b16 %v411, %v410
        %v427 = vpack.c.b16 %v413, %v412
        %v428 = vpack.c.b16 %v415, %v414
        %v429 = vpack.c.b16 %v417, %v416
        %v430 = vpack.c.b16 %v419, %v418
        %v431 = vpack.c.b16 %v421, %v420
        %v432 = vpack.c.b16 %v423, %v422
        %v433 = vpack.c.b16 %v425, %v424
        %442 = vmatprep.subr.bf16.mxu0 0
        %443 = vmatpush1.bf16.msra.mxu0 %v426
        %444 = vmatprep.subr.bf16.mxu0 0
        %445 = vmatpush1.bf16.msra.mxu0 %v427
        %446 = vmatprep.subr.bf16.mxu0 0
        %447 = vmatpush1.bf16.msra.mxu0 %v428
        %448 = vmatprep.subr.bf16.mxu0 0
        %449 = vmatpush1.bf16.msra.mxu0 %v429
        %450 = vmatprep.subr.bf16.mxu0 0
        %451 = vmatpush1.bf16.msra.mxu0 %v430
        %452 = vmatprep.subr.bf16.mxu0 0
        %453 = vmatpush1.bf16.msra.mxu0 %v431
        %454 = vmatprep.subr.bf16.mxu0 0
        %455 = vmatpush1.bf16.msra.mxu0 %v432
        %456 = vmatprep.subr.bf16.mxu0 0
        %457 = vmatpush1.bf16.msra.mxu0 %v433
        %458 = vmatprep.subr.bf16.mxu0 0
        %459 = vmatpush1.bf16.msra.mxu0 0
        %460 = vmatprep.subr.bf16.mxu0 0
        %461 = vmatpush1.bf16.msra.mxu0 0
        %462 = vmatprep.subr.bf16.mxu0 0
        %463 = vmatpush1.bf16.msra.mxu0 0
        %464 = vmatprep.subr.bf16.mxu0 0
        %465 = vmatpush1.bf16.msra.mxu0 0
        %466 = vmatprep.subr.bf16.mxu0 0
        %467 = vmatpush1.bf16.msra.mxu0 0
        %468 = vmatprep.subr.bf16.mxu0 0
        %469 = vmatpush1.bf16.msra.mxu0 0
        %470 = vmatprep.subr.bf16.mxu0 0
        %471 = vmatpush1.bf16.msra.mxu0 0
        %472 = vmatprep.subr.bf16.mxu0 0
        %473 = vmatpush1.bf16.msra.mxu0 0
        %474 = vmatprep.mubr.bf16.mxu0 0
        %475 = vmatmul.mubr.bf16.gmra.mrb[0].mxu0 %v339
        %v476 = vpop.f32.mrb[0].mxu0
        %v477 = vadd.f32 %v392, %v476
        %v478 = vpop.f32.mrb[0].mxu0
        %v479 = vpop.f32.mrb[0].mxu0
        %v480 = vadd.f32 %v392, %v479
        %v481 = vpop.f32.mrb[0].mxu0
        %482 = vmatprep.mubr.bf16.mxu0 0
        %483 = vmatmul.mubr.bf16.gmra.mrb[0].mxu0 %v340
        %v484 = vpop.f32.mrb[0].mxu0
        %v485 = vadd.f32 %v392, %v484
        %v486 = vpop.f32.mrb[0].mxu0
        %v487 = vpop.f32.mrb[0].mxu0
        %v488 = vadd.f32 %v392, %v487
        %v489 = vpop.f32.mrb[0].mxu0
        %490 = vmatprep.mubr.bf16.mxu0 0
        %491 = vmatmul.mubr.bf16.gmra.mrb[0].mxu0 %v341
        %v492 = vpop.f32.mrb[0].mxu0
        %v493 = vadd.f32 %v392, %v492
        %v494 = vpop.f32.mrb[0].mxu0
        %v495 = vpop.f32.mrb[0].mxu0
        %v496 = vadd.f32 %v392, %v495
        %v497 = vpop.f32.mrb[0].mxu0
        %498 = vmatprep.mubr.bf16.mxu0 0
        %499 = vmatmul.mubr.bf16.gmra.mrb[0].mxu0 %v342
        %v500 = vpop.f32.mrb[0].mxu0
        %v501 = vadd.f32 %v392, %v500
        %v502 = vpop.f32.mrb[0].mxu0
        %v503 = vpop.f32.mrb[0].mxu0
        %v504 = vadd.f32 %v392, %v503
        %v505 = vpop.f32.mrb[0].mxu0
        %506 = vmatprep.mubr.bf16.mxu0 0
        %507 = vmatmul.mubr.bf16.gmra.mrb[0].mxu0 %v343
        %v508 = vpop.f32.mrb[0].mxu0
        %v509 = vadd.f32 %v392, %v508
        %v510 = vpop.f32.mrb[0].mxu0
        %v511 = vpop.f32.mrb[0].mxu0
        %v512 = vadd.f32 %v392, %v511
        %v513 = vpop.f32.mrb[0].mxu0
        %514 = vmatprep.mubr.bf16.mxu0 0
        %515 = vmatmul.mubr.bf16.gmra.mrb[0].mxu0 %v344
        %v516 = vpop.f32.mrb[0].mxu0
        %v517 = vadd.f32 %v392, %v516
        %v518 = vpop.f32.mrb[0].mxu0
        %v519 = vpop.f32.mrb[0].mxu0
        %v520 = vadd.f32 %v392, %v519
        %v521 = vpop.f32.mrb[0].mxu0
        %522 = vmatprep.mubr.bf16.mxu0 0
        %523 = vmatmul.mubr.bf16.gmra.mrb[0].mxu0 %v345
        %v524 = vpop.f32.mrb[0].mxu0
        %v525 = vadd.f32 %v392, %v524
        %v526 = vpop.f32.mrb[0].mxu0
        %v527 = vpop.f32.mrb[0].mxu0
        %v528 = vadd.f32 %v392, %v527
        %v529 = vpop.f32.mrb[0].mxu0
        %530 = vmatprep.mubr.bf16.mxu0 0
        %531 = vmatmul.mubr.bf16.gmra.mrb[0].mxu0 %v346
        %v532 = vpop.f32.mrb[0].mxu0
        %v533 = vadd.f32 %v392, %v532
        %v534 = vpop.f32.mrb[0].mxu0
        %v535 = vpop.f32.mrb[0].mxu0
        %v536 = vadd.f32 %v392, %v535
        %v537 = vpop.f32.mrb[0].mxu0
        %538 = vmatprep.mubr.bf16.mxu0 0
        %539 = vmatmul.mubr.bf16.gmra.mrb[0].mxu0 %v347
        %v540 = vpop.f32.mrb[0].mxu0
        %v541 = vadd.f32 %v392, %v540
        %v542 = vpop.f32.mrb[0].mxu0
        %v543 = vpop.f32.mrb[0].mxu0
        %v544 = vadd.f32 %v392, %v543
        %v545 = vpop.f32.mrb[0].mxu0
        %546 = vmatprep.mubr.bf16.mxu0 0
        %547 = vmatmul.mubr.bf16.gmra.mrb[0].mxu0 %v348
        %v548 = vpop.f32.mrb[0].mxu0
        %v549 = vadd.f32 %v392, %v548
        %v550 = vpop.f32.mrb[0].mxu0
        %v551 = vpop.f32.mrb[0].mxu0
        %v552 = vadd.f32 %v392, %v551
        %v553 = vpop.f32.mrb[0].mxu0
        %554 = vmatprep.mubr.bf16.mxu0 0
        %555 = vmatmul.mubr.bf16.gmra.mrb[0].mxu0 %v349
        %v556 = vpop.f32.mrb[0].mxu0
        %v557 = vadd.f32 %v392, %v556
        %v558 = vpop.f32.mrb[0].mxu0
        %v559 = vpop.f32.mrb[0].mxu0
        %v560 = vadd.f32 %v392, %v559
        %v561 = vpop.f32.mrb[0].mxu0
        %562 = vmatprep.mubr.bf16.mxu0 0
        %563 = vmatmul.mubr.bf16.gmra.mrb[0].mxu0 %v350
        %v564 = vpop.f32.mrb[0].mxu0
        %v565 = vadd.f32 %v392, %v564
        %v566 = vpop.f32.mrb[0].mxu0
        %v567 = vpop.f32.mrb[0].mxu0
        %v568 = vadd.f32 %v392, %v567
        %v569 = vpop.f32.mrb[0].mxu0
        %570 = vmatprep.mubr.bf16.mxu0 0
        %571 = vmatmul.mubr.bf16.gmra.mrb[0].mxu0 %v351
        %v572 = vpop.f32.mrb[0].mxu0
        %v573 = vadd.f32 %v392, %v572
        %v574 = vpop.f32.mrb[0].mxu0
        %v575 = vpop.f32.mrb[0].mxu0
        %v576 = vadd.f32 %v392, %v575
        %v577 = vpop.f32.mrb[0].mxu0
        %578 = vmatprep.mubr.bf16.mxu0 0
        %579 = vmatmul.mubr.bf16.gmra.mrb[0].mxu0 %v352
        %v580 = vpop.f32.mrb[0].mxu0
        %v581 = vadd.f32 %v392, %v580
        %v582 = vpop.f32.mrb[0].mxu0
        %v583 = vpop.f32.mrb[0].mxu0
        %v584 = vadd.f32 %v392, %v583
        %v585 = vpop.f32.mrb[0].mxu0
        %586 = vmatprep.mubr.bf16.mxu0 0
        %587 = vmatmul.mubr.bf16.gmra.mrb[0].mxu0 %v353
        %v588 = vpop.f32.mrb[0].mxu0
        %v589 = vadd.f32 %v392, %v588
        %v590 = vpop.f32.mrb[0].mxu0
        %v591 = vpop.f32.mrb[0].mxu0
        %v592 = vadd.f32 %v392, %v591
        %v593 = vpop.f32.mrb[0].mxu0
        %594 = vmatprep.mubr.bf16.mxu0 0
        %595 = vmatmul.mubr.bf16.gmra.mrb[0].mxu0 %v354
        %v596 = vpop.f32.mrb[0].mxu0
        %v597 = vadd.f32 %v392, %v596
        %v598 = vpop.f32.mrb[0].mxu0
        %v599 = vpop.f32.mrb[0].mxu0
        %v600 = vadd.f32 %v392, %v599
        %v601 = vpop.f32.mrb[0].mxu0
        %602 = vmatprep.mubr.bf16.mxu0 0
        %603 = vmatmul.mubr.bf16.gmra.mrb[0].mxu0 %v355
        %v604 = vpop.f32.mrb[0].mxu0
        %v605 = vadd.f32 %v392, %v604
        %v606 = vpop.f32.mrb[0].mxu0
        %v607 = vpop.f32.mrb[0].mxu0
        %v608 = vadd.f32 %v392, %v607
        %v609 = vpop.f32.mrb[0].mxu0
        %610 = vmatprep.mubr.bf16.mxu0 0
        %611 = vmatmul.mubr.bf16.gmra.mrb[0].mxu0 %v356
        %v612 = vpop.f32.mrb[0].mxu0
        %v613 = vadd.f32 %v392, %v612
        %v614 = vpop.f32.mrb[0].mxu0
        %v615 = vpop.f32.mrb[0].mxu0
        %v616 = vadd.f32 %v392, %v615
        %v617 = vpop.f32.mrb[0].mxu0
        %618 = vmatprep.mubr.bf16.mxu0 0
        %619 = vmatmul.mubr.bf16.gmra.mrb[0].mxu0 %v357
        %v620 = vpop.f32.mrb[0].mxu0
        %v621 = vadd.f32 %v392, %v620
        %v622 = vpop.f32.mrb[0].mxu0
        %v623 = vpop.f32.mrb[0].mxu0
        %v624 = vadd.f32 %v392, %v623
        %v625 = vpop.f32.mrb[0].mxu0
        %626 = vmatprep.mubr.bf16.mxu0 0
        %627 = vmatmul.mubr.bf16.gmra.mrb[0].mxu0 %v358
        %v628 = vpop.f32.mrb[0].mxu0
        %v629 = vadd.f32 %v392, %v628
        %v630 = vpop.f32.mrb[0].mxu0
        %v631 = vpop.f32.mrb[0].mxu0
        %v632 = vadd.f32 %v392, %v631
        %v633 = vpop.f32.mrb[0].mxu0
        %634 = vmatprep.mubr.bf16.mxu0 0
        %635 = vmatmul.mubr.bf16.gmra.mrb[0].mxu0 %v359
        %v636 = vpop.f32.mrb[0].mxu0
        %v637 = vadd.f32 %v392, %v636
        %v638 = vpop.f32.mrb[0].mxu0
        %v639 = vpop.f32.mrb[0].mxu0
        %v640 = vadd.f32 %v392, %v639
        %v641 = vpop.f32.mrb[0].mxu0
        %642 = vmatprep.mubr.bf16.mxu0 0
        %643 = vmatmul.mubr.bf16.gmra.mrb[0].mxu0 %v360
        %v644 = vpop.f32.mrb[0].mxu0
        %v645 = vadd.f32 %v392, %v644
        %v646 = vpop.f32.mrb[0].mxu0
        %v647 = vpop.f32.mrb[0].mxu0
        %v648 = vadd.f32 %v392, %v647
        %v649 = vpop.f32.mrb[0].mxu0
        %650 = vmatprep.mubr.bf16.mxu0 0
        %651 = vmatmul.mubr.bf16.gmra.mrb[0].mxu0 %v361
        %v652 = vpop.f32.mrb[0].mxu0
        %v653 = vadd.f32 %v392, %v652
        %v654 = vpop.f32.mrb[0].mxu0
        %v655 = vpop.f32.mrb[0].mxu0
        %v656 = vadd.f32 %v392, %v655
        %v657 = vpop.f32.mrb[0].mxu0
        %658 = vmatprep.mubr.bf16.mxu0 0
        %659 = vmatmul.mubr.bf16.gmra.mrb[0].mxu0 %v362
        %v660 = vpop.f32.mrb[0].mxu0
        %v661 = vadd.f32 %v392, %v660
        %v662 = vpop.f32.mrb[0].mxu0
        %v663 = vpop.f32.mrb[0].mxu0
        %v664 = vadd.f32 %v392, %v663
        %v665 = vpop.f32.mrb[0].mxu0
        %666 = vmatprep.mubr.bf16.mxu0 0
        %667 = vmatmul.mubr.bf16.gmra.mrb[0].mxu0 %v363
        %v668 = vpop.f32.mrb[0].mxu0
        %v669 = vadd.f32 %v392, %v668
        %v670 = vpop.f32.mrb[0].mxu0
        %v671 = vpop.f32.mrb[0].mxu0
        %v672 = vadd.f32 %v392, %v671
        %v673 = vpop.f32.mrb[0].mxu0
        %674 = vmatprep.mubr.bf16.mxu0 0
        %675 = vmatmul.mubr.bf16.gmra.mrb[0].mxu0 %v364
        %v676 = vpop.f32.mrb[0].mxu0
        %v677 = vadd.f32 %v392, %v676
        %v678 = vpop.f32.mrb[0].mxu0
        %v679 = vpop.f32.mrb[0].mxu0
        %v680 = vadd.f32 %v392, %v679
        %v681 = vpop.f32.mrb[0].mxu0
        %682 = vmatprep.mubr.bf16.mxu0 0
        %683 = vmatmul.mubr.bf16.gmra.mrb[0].mxu0 %v365
        %v684 = vpop.f32.mrb[0].mxu0
        %v685 = vadd.f32 %v392, %v684
        %v686 = vpop.f32.mrb[0].mxu0
        %v687 = vpop.f32.mrb[0].mxu0
        %v688 = vadd.f32 %v392, %v687
        %v689 = vpop.f32.mrb[0].mxu0
        %690 = vmatprep.mubr.bf16.mxu0 0
        %691 = vmatmul.mubr.bf16.gmra.mrb[0].mxu0 %v366
        %v692 = vpop.f32.mrb[0].mxu0
        %v693 = vadd.f32 %v392, %v692
        %v694 = vpop.f32.mrb[0].mxu0
        %v695 = vpop.f32.mrb[0].mxu0
        %v696 = vadd.f32 %v392, %v695
        %v697 = vpop.f32.mrb[0].mxu0
        %698 = vmatprep.mubr.bf16.mxu0 0
        %699 = vmatmul.mubr.bf16.gmra.mrb[0].mxu0 %v367
        %v700 = vpop.f32.mrb[0].mxu0
        %v701 = vadd.f32 %v392, %v700
        %v702 = vpop.f32.mrb[0].mxu0
        %v703 = vpop.f32.mrb[0].mxu0
        %v704 = vadd.f32 %v392, %v703
        %v705 = vpop.f32.mrb[0].mxu0
        %706 = vmatprep.mubr.bf16.mxu0 0
        %707 = vmatmul.mubr.bf16.gmra.mrb[0].mxu0 %v368
        %v708 = vpop.f32.mrb[0].mxu0
        %v709 = vadd.f32 %v392, %v708
        %v710 = vpop.f32.mrb[0].mxu0
        %v711 = vpop.f32.mrb[0].mxu0
        %v712 = vadd.f32 %v392, %v711
        %v713 = vpop.f32.mrb[0].mxu0
        %714 = vmatprep.mubr.bf16.mxu0 0
        %715 = vmatmul.mubr.bf16.gmra.mrb[0].mxu0 %v369
        %v716 = vpop.f32.mrb[0].mxu0
        %v717 = vadd.f32 %v392, %v716
        %v718 = vpop.f32.mrb[0].mxu0
        %v719 = vpop.f32.mrb[0].mxu0
        %v720 = vadd.f32 %v392, %v719
        %v721 = vpop.f32.mrb[0].mxu0
        %722 = vmatprep.mubr.bf16.mxu0 0
        %723 = vmatmul.mubr.bf16.gmra.mrb[0].mxu0 %v370
        %v724 = vpop.f32.mrb[0].mxu0
        %v725 = vadd.f32 %v392, %v724
        %v726 = vpop.f32.mrb[0].mxu0
        %v727 = vpop.f32.mrb[0].mxu0
        %v728 = vadd.f32 %v392, %v727
        %v729 = vpop.f32.mrb[0].mxu0
        %730 = vdwg.mxu0
        %v731 = vmax.f32 %v477, 0.0
        %v732 = vmax.f32 %v480, 0.0
        %v733 = vmax.f32 %v485, 0.0
        %v734 = vmax.f32 %v488, 0.0
        %v735 = vmax.f32 %v493, 0.0
        %v736 = vmax.f32 %v496, 0.0
        %v737 = vmax.f32 %v501, 0.0
        %v738 = vmax.f32 %v504, 0.0
        %v739 = vmax.f32 %v509, 0.0
        %v740 = vmax.f32 %v512, 0.0
        %v741 = vmax.f32 %v517, 0.0
        %v742 = vmax.f32 %v520, 0.0
        %v743 = vmax.f32 %v525, 0.0
        %v744 = vmax.f32 %v528, 0.0
        %v745 = vmax.f32 %v533, 0.0
        %v746 = vmax.f32 %v536, 0.0
        %v747 = vmax.f32 %v541, 0.0
        %v748 = vmax.f32 %v544, 0.0
        %v749 = vmax.f32 %v549, 0.0
        %v750 = vmax.f32 %v552, 0.0
        %v751 = vmax.f32 %v557, 0.0
        %v752 = vmax.f32 %v560, 0.0
        %v753 = vmax.f32 %v565, 0.0
        %v754 = vmax.f32 %v568, 0.0
        %v755 = vmax.f32 %v573, 0.0
        %v756 = vmax.f32 %v576, 0.0
        %v757 = vmax.f32 %v581, 0.0
        %v758 = vmax.f32 %v584, 0.0
        %v759 = vmax.f32 %v589, 0.0
        %v760 = vmax.f32 %v592, 0.0
        %v761 = vmax.f32 %v597, 0.0
        %v762 = vmax.f32 %v600, 0.0
        %v763 = vmax.f32 %v605, 0.0
        %v764 = vmax.f32 %v608, 0.0
        %v765 = vmax.f32 %v613, 0.0
        %v766 = vmax.f32 %v616, 0.0
        %v767 = vmax.f32 %v621, 0.0
        %v768 = vmax.f32 %v624, 0.0
        %v769 = vmax.f32 %v629, 0.0
        %v770 = vmax.f32 %v632, 0.0
        %v771 = vmax.f32 %v637, 0.0
        %v772 = vmax.f32 %v640, 0.0
        %v773 = vmax.f32 %v645, 0.0
        %v774 = vmax.f32 %v648, 0.0
        %v775 = vmax.f32 %v653, 0.0
        %v776 = vmax.f32 %v656, 0.0
        %v777 = vmax.f32 %v661, 0.0
        %v778 = vmax.f32 %v664, 0.0
        %v779 = vmax.f32 %v669, 0.0
        %v780 = vmax.f32 %v672, 0.0
        %v781 = vmax.f32 %v677, 0.0
        %v782 = vmax.f32 %v680, 0.0
        %v783 = vmax.f32 %v685, 0.0
        %v784 = vmax.f32 %v688, 0.0
        %v785 = vmax.f32 %v693, 0.0
        %v786 = vmax.f32 %v696, 0.0
        %v787 = vmax.f32 %v701, 0.0
        %v788 = vmax.f32 %v704, 0.0
        %v789 = vmax.f32 %v709, 0.0
        %v790 = vmax.f32 %v712, 0.0
        %v791 = vmax.f32 %v717, 0.0
        %v792 = vmax.f32 %v720, 0.0
        %v793 = vmax.f32 %v725, 0.0
        %v794 = vmax.f32 %v728, 0.0
        %v795 = vpack.c.bf16 %v732, %v731
        %v796 = vpack.c.bf16 %v734, %v733
        %v797 = vpack.c.bf16 %v736, %v735
        %v798 = vpack.c.bf16 %v738, %v737
        %v799 = vpack.c.bf16 %v740, %v739
        %v800 = vpack.c.bf16 %v742, %v741
        %v801 = vpack.c.bf16 %v744, %v743
        %v802 = vpack.c.bf16 %v746, %v745
        %v803 = vpack.c.bf16 %v748, %v747
        %v804 = vpack.c.bf16 %v750, %v749
        %v805 = vpack.c.bf16 %v752, %v751
        %v806 = vpack.c.bf16 %v754, %v753
        %v807 = vpack.c.bf16 %v756, %v755
        %v808 = vpack.c.bf16 %v758, %v757
        %v809 = vpack.c.bf16 %v760, %v759
        %v810 = vpack.c.bf16 %v762, %v761
        %v811 = vpack.c.bf16 %v764, %v763
        %v812 = vpack.c.bf16 %v766, %v765
        %v813 = vpack.c.bf16 %v768, %v767
        %v814 = vpack.c.bf16 %v770, %v769
        %v815 = vpack.c.bf16 %v772, %v771
        %v816 = vpack.c.bf16 %v774, %v773
        %v817 = vpack.c.bf16 %v776, %v775
        %v818 = vpack.c.bf16 %v778, %v777
        %v819 = vpack.c.bf16 %v780, %v779
        %v820 = vpack.c.bf16 %v782, %v781
        %v821 = vpack.c.bf16 %v784, %v783
        %v822 = vpack.c.bf16 %v786, %v785
        %v823 = vpack.c.bf16 %v788, %v787
        %v824 = vpack.c.bf16 %v790, %v789
        %v825 = vpack.c.bf16 %v792, %v791
        %v826 = vpack.c.bf16 %v794, %v793
        %v827 = vld [vmem:[#allocation7] sm:$0xf]
        %v828 = vld [vmem:[#allocation7 + $0x4] sm:$0xf]
        %v829 = vld [vmem:[#allocation7 + $0x8] sm:$0xf]
        %v830 = vld [vmem:[#allocation7 + $0xc] sm:$0xf]
        %v831 = vld [vmem:[#allocation7 + $0x10] sm:$0xf]
        %v832 = vld [vmem:[#allocation7 + $0x14] sm:$0xf]
        %v833 = vld [vmem:[#allocation7 + $0x18] sm:$0xf]
        %v834 = vld [vmem:[#allocation7 + $0x1c] sm:$0xf]
        %v835 = vld [vmem:[#allocation7 + $0x20] sm:$0xf]
        %v836 = vld [vmem:[#allocation7 + $0x24] sm:$0xf]
        %v837 = vld [vmem:[#allocation7 + $0x28] sm:$0xf]
        %v838 = vld [vmem:[#allocation7 + $0x2c] sm:$0xf]
        %v839 = vld [vmem:[#allocation7 + $0x30] sm:$0xf]
        %v840 = vld [vmem:[#allocation7 + $0x34] sm:$0xf]
        %v841 = vld [vmem:[#allocation7 + $0x38] sm:$0xf]
        %v842 = vld [vmem:[#allocation7 + $0x3c] sm:$0xf]
        %v843 = vld [vmem:[%s4] sm:$0x1]
        %v845 = vlaneseq
        %v846 = vshrl.u32 %v845, 7
        %v847 = vsub.s32 0, %v846
        %v848 = vrot.slane %v843, %v847
        %v866 = vunpack.c.l.b16 %v827
        %v867 = vunpack.c.l.b16 %v828
        %v868 = vunpack.c.l.b16 %v829
        %v869 = vunpack.c.l.b16 %v830
        %v870 = vunpack.c.l.b16 %v831
        %v871 = vunpack.c.l.b16 %v832
        %v872 = vunpack.c.l.b16 %v833
        %v873 = vunpack.c.l.b16 %v834
        %v874 = vunpack.c.l.b16 %v835
        %v875 = vunpack.c.l.b16 %v836
        %v876 = vunpack.c.l.b16 %v837
        %v877 = vunpack.c.l.b16 %v838
        %v878 = vunpack.c.l.b16 %v839
        %v879 = vunpack.c.l.b16 %v840
        %v880 = vunpack.c.l.b16 %v841
        %v881 = vunpack.c.l.b16 %v842
        %v882 = vpack.c.b16 %v867, %v866
        %v883 = vpack.c.b16 %v869, %v868
        %v884 = vpack.c.b16 %v871, %v870
        %v885 = vpack.c.b16 %v873, %v872
        %v886 = vpack.c.b16 %v875, %v874
        %v887 = vpack.c.b16 %v877, %v876
        %v888 = vpack.c.b16 %v879, %v878
        %v889 = vpack.c.b16 %v881, %v880
        %898 = vmatprep.subr.bf16.mxu0 0
        %899 = vmatpush1.bf16.msra.mxu0 %v882
        %900 = vmatprep.subr.bf16.mxu0 0
        %901 = vmatpush1.bf16.msra.mxu0 %v883
        %902 = vmatprep.subr.bf16.mxu0 0
        %903 = vmatpush1.bf16.msra.mxu0 %v884
        %904 = vmatprep.subr.bf16.mxu0 0
        %905 = vmatpush1.bf16.msra.mxu0 %v885
        %906 = vmatprep.subr.bf16.mxu0 0
        %907 = vmatpush1.bf16.msra.mxu0 %v886
        %908 = vmatprep.subr.bf16.mxu0 0
        %909 = vmatpush1.bf16.msra.mxu0 %v887
        %910 = vmatprep.subr.bf16.mxu0 0
        %911 = vmatpush1.bf16.msra.mxu0 %v888
        %912 = vmatprep.subr.bf16.mxu0 0
        %913 = vmatpush1.bf16.msra.mxu0 %v889
        %914 = vmatprep.subr.bf16.mxu0 0
        %915 = vmatpush1.bf16.msra.mxu0 0
        %916 = vmatprep.subr.bf16.mxu0 0
        %917 = vmatpush1.bf16.msra.mxu0 0
        %918 = vmatprep.subr.bf16.mxu0 0
        %919 = vmatpush1.bf16.msra.mxu0 0
        %920 = vmatprep.subr.bf16.mxu0 0
        %921 = vmatpush1.bf16.msra.mxu0 0
        %922 = vmatprep.subr.bf16.mxu0 0
        %923 = vmatpush1.bf16.msra.mxu0 0
        %924 = vmatprep.subr.bf16.mxu0 0
        %925 = vmatpush1.bf16.msra.mxu0 0
        %926 = vmatprep.subr.bf16.mxu0 0
        %927 = vmatpush1.bf16.msra.mxu0 0
        %928 = vmatprep.subr.bf16.mxu0 0
        %929 = vmatpush1.bf16.msra.mxu0 0
        %930 = vmatprep.mubr.bf16.mxu0 0
        %931 = vmatmul.mubr.bf16.gmra.mrb[0].mxu0 %v795
        %v932 = vpop.f32.mrb[0].mxu0
        %v933 = vadd.f32 %v848, %v932
        %v934 = vpop.f32.mrb[0].mxu0
        %v935 = vpop.f32.mrb[0].mxu0
        %v936 = vadd.f32 %v848, %v935
        %v937 = vpop.f32.mrb[0].mxu0
        %938 = vmatprep.mubr.bf16.mxu0 0
        %939 = vmatmul.mubr.bf16.gmra.mrb[0].mxu0 %v796
        %v940 = vpop.f32.mrb[0].mxu0
        %v941 = vadd.f32 %v848, %v940
        %v942 = vpop.f32.mrb[0].mxu0
        %v943 = vpop.f32.mrb[0].mxu0
        %v944 = vadd.f32 %v848, %v943
        %v945 = vpop.f32.mrb[0].mxu0
        %946 = vmatprep.mubr.bf16.mxu0 0
        %947 = vmatmul.mubr.bf16.gmra.mrb[0].mxu0 %v797
        %v948 = vpop.f32.mrb[0].mxu0
        %v949 = vadd.f32 %v848, %v948
        %v950 = vpop.f32.mrb[0].mxu0
        %v951 = vpop.f32.mrb[0].mxu0
        %v952 = vadd.f32 %v848, %v951
        %v953 = vpop.f32.mrb[0].mxu0
        %954 = vmatprep.mubr.bf16.mxu0 0
        %955 = vmatmul.mubr.bf16.gmra.mrb[0].mxu0 %v798
        %v956 = vpop.f32.mrb[0].mxu0
        %v957 = vadd.f32 %v848, %v956
        %v958 = vpop.f32.mrb[0].mxu0
        %v959 = vpop.f32.mrb[0].mxu0
        %v960 = vadd.f32 %v848, %v959
        %v961 = vpop.f32.mrb[0].mxu0
        %962 = vmatprep.mubr.bf16.mxu0 0
        %963 = vmatmul.mubr.bf16.gmra.mrb[0].mxu0 %v799
        %v964 = vpop.f32.mrb[0].mxu0
        %v965 = vadd.f32 %v848, %v964
        %v966 = vpop.f32.mrb[0].mxu0
        %v967 = vpop.f32.mrb[0].mxu0
        %v968 = vadd.f32 %v848, %v967
        %v969 = vpop.f32.mrb[0].mxu0
        %970 = vmatprep.mubr.bf16.mxu0 0
        %971 = vmatmul.mubr.bf16.gmra.mrb[0].mxu0 %v800
        %v972 = vpop.f32.mrb[0].mxu0
        %v973 = vadd.f32 %v848, %v972
        %v974 = vpop.f32.mrb[0].mxu0
        %v975 = vpop.f32.mrb[0].mxu0
        %v976 = vadd.f32 %v848, %v975
        %v977 = vpop.f32.mrb[0].mxu0
        %978 = vmatprep.mubr.bf16.mxu0 0
        %979 = vmatmul.mubr.bf16.gmra.mrb[0].mxu0 %v801
        %v980 = vpop.f32.mrb[0].mxu0
        %v981 = vadd.f32 %v848, %v980
        %v982 = vpop.f32.mrb[0].mxu0
        %v983 = vpop.f32.mrb[0].mxu0
        %v984 = vadd.f32 %v848, %v983
        %v985 = vpop.f32.mrb[0].mxu0
        %986 = vmatprep.mubr.bf16.mxu0 0
        %987 = vmatmul.mubr.bf16.gmra.mrb[0].mxu0 %v802
        %v988 = vpop.f32.mrb[0].mxu0
        %v989 = vadd.f32 %v848, %v988
        %v990 = vpop.f32.mrb[0].mxu0
        %v991 = vpop.f32.mrb[0].mxu0
        %v992 = vadd.f32 %v848, %v991
        %v993 = vpop.f32.mrb[0].mxu0
        %994 = vmatprep.mubr.bf16.mxu0 0
        %995 = vmatmul.mubr.bf16.gmra.mrb[0].mxu0 %v803
        %v996 = vpop.f32.mrb[0].mxu0
        %v997 = vadd.f32 %v848, %v996
        %v998 = vpop.f32.mrb[0].mxu0
        %v999 = vpop.f32.mrb[0].mxu0
        %v1000 = vadd.f32 %v848, %v999
        %v1001 = vpop.f32.mrb[0].mxu0
        %1002 = vmatprep.mubr.bf16.mxu0 0
        %1003 = vmatmul.mubr.bf16.gmra.mrb[0].mxu0 %v804
        %v1004 = vpop.f32.mrb[0].mxu0
        %v1005 = vadd.f32 %v848, %v1004
        %v1006 = vpop.f32.mrb[0].mxu0
        %v1007 = vpop.f32.mrb[0].mxu0
        %v1008 = vadd.f32 %v848, %v1007
        %v1009 = vpop.f32.mrb[0].mxu0
        %1010 = vmatprep.mubr.bf16.mxu0 0
        %1011 = vmatmul.mubr.bf16.gmra.mrb[0].mxu0 %v805
        %v1012 = vpop.f32.mrb[0].mxu0
        %v1013 = vadd.f32 %v848, %v1012
        %v1014 = vpop.f32.mrb[0].mxu0
        %v1015 = vpop.f32.mrb[0].mxu0
        %v1016 = vadd.f32 %v848, %v1015
        %v1017 = vpop.f32.mrb[0].mxu0
        %1018 = vmatprep.mubr.bf16.mxu0 0
        %1019 = vmatmul.mubr.bf16.gmra.mrb[0].mxu0 %v806
        %v1020 = vpop.f32.mrb[0].mxu0
        %v1021 = vadd.f32 %v848, %v1020
        %v1022 = vpop.f32.mrb[0].mxu0
        %v1023 = vpop.f32.mrb[0].mxu0
        %v1024 = vadd.f32 %v848, %v1023
        %v1025 = vpop.f32.mrb[0].mxu0
        %1026 = vmatprep.mubr.bf16.mxu0 0
        %1027 = vmatmul.mubr.bf16.gmra.mrb[0].mxu0 %v807
        %v1028 = vpop.f32.mrb[0].mxu0
        %v1029 = vadd.f32 %v848, %v1028
        %v1030 = vpop.f32.mrb[0].mxu0
        %v1031 = vpop.f32.mrb[0].mxu0
        %v1032 = vadd.f32 %v848, %v1031
        %v1033 = vpop.f32.mrb[0].mxu0
        %1034 = vmatprep.mubr.bf16.mxu0 0
        %1035 = vmatmul.mubr.bf16.gmra.mrb[0].mxu0 %v808
        %v1036 = vpop.f32.mrb[0].mxu0
        %v1037 = vadd.f32 %v848, %v1036
        %v1038 = vpop.f32.mrb[0].mxu0
        %v1039 = vpop.f32.mrb[0].mxu0
        %v1040 = vadd.f32 %v848, %v1039
        %v1041 = vpop.f32.mrb[0].mxu0
        %1042 = vmatprep.mubr.bf16.mxu0 0
        %1043 = vmatmul.mubr.bf16.gmra.mrb[0].mxu0 %v809
        %v1044 = vpop.f32.mrb[0].mxu0
        %v1045 = vadd.f32 %v848, %v1044
        %v1046 = vpop.f32.mrb[0].mxu0
        %v1047 = vpop.f32.mrb[0].mxu0
        %v1048 = vadd.f32 %v848, %v1047
        %v1049 = vpop.f32.mrb[0].mxu0
        %1050 = vmatprep.mubr.bf16.mxu0 0
        %1051 = vmatmul.mubr.bf16.gmra.mrb[0].mxu0 %v810
        %v1052 = vpop.f32.mrb[0].mxu0
        %v1053 = vadd.f32 %v848, %v1052
        %v1054 = vpop.f32.mrb[0].mxu0
        %v1055 = vpop.f32.mrb[0].mxu0
        %v1056 = vadd.f32 %v848, %v1055
        %v1057 = vpop.f32.mrb[0].mxu0
        %1058 = vmatprep.mubr.bf16.mxu0 0
        %1059 = vmatmul.mubr.bf16.gmra.mrb[0].mxu0 %v811
        %v1060 = vpop.f32.mrb[0].mxu0
        %v1061 = vadd.f32 %v848, %v1060
        %v1062 = vpop.f32.mrb[0].mxu0
        %v1063 = vpop.f32.mrb[0].mxu0
        %v1064 = vadd.f32 %v848, %v1063
        %v1065 = vpop.f32.mrb[0].mxu0
        %1066 = vmatprep.mubr.bf16.mxu0 0
        %1067 = vmatmul.mubr.bf16.gmra.mrb[0].mxu0 %v812
        %v1068 = vpop.f32.mrb[0].mxu0
        %v1069 = vadd.f32 %v848, %v1068
        %v1070 = vpop.f32.mrb[0].mxu0
        %v1071 = vpop.f32.mrb[0].mxu0
        %v1072 = vadd.f32 %v848, %v1071
        %v1073 = vpop.f32.mrb[0].mxu0
        %1074 = vmatprep.mubr.bf16.mxu0 0
        %1075 = vmatmul.mubr.bf16.gmra.mrb[0].mxu0 %v813
        %v1076 = vpop.f32.mrb[0].mxu0
        %v1077 = vadd.f32 %v848, %v1076
        %v1078 = vpop.f32.mrb[0].mxu0
        %v1079 = vpop.f32.mrb[0].mxu0
        %v1080 = vadd.f32 %v848, %v1079
        %v1081 = vpop.f32.mrb[0].mxu0
        %1082 = vmatprep.mubr.bf16.mxu0 0
        %1083 = vmatmul.mubr.bf16.gmra.mrb[0].mxu0 %v814
        %v1084 = vpop.f32.mrb[0].mxu0
        %v1085 = vadd.f32 %v848, %v1084
        %v1086 = vpop.f32.mrb[0].mxu0
        %v1087 = vpop.f32.mrb[0].mxu0
        %v1088 = vadd.f32 %v848, %v1087
        %v1089 = vpop.f32.mrb[0].mxu0
        %1090 = vmatprep.mubr.bf16.mxu0 0
        %1091 = vmatmul.mubr.bf16.gmra.mrb[0].mxu0 %v815
        %v1092 = vpop.f32.mrb[0].mxu0
        %v1093 = vadd.f32 %v848, %v1092
        %v1094 = vpop.f32.mrb[0].mxu0
        %v1095 = vpop.f32.mrb[0].mxu0
        %v1096 = vadd.f32 %v848, %v1095
        %v1097 = vpop.f32.mrb[0].mxu0
        %1098 = vmatprep.mubr.bf16.mxu0 0
        %1099 = vmatmul.mubr.bf16.gmra.mrb[0].mxu0 %v816
        %v1100 = vpop.f32.mrb[0].mxu0
        %v1101 = vadd.f32 %v848, %v1100
        %v1102 = vpop.f32.mrb[0].mxu0
        %v1103 = vpop.f32.mrb[0].mxu0
        %v1104 = vadd.f32 %v848, %v1103
        %v1105 = vpop.f32.mrb[0].mxu0
        %1106 = vmatprep.mubr.bf16.mxu0 0
        %1107 = vmatmul.mubr.bf16.gmra.mrb[0].mxu0 %v817
        %v1108 = vpop.f32.mrb[0].mxu0
        %v1109 = vadd.f32 %v848, %v1108
        %v1110 = vpop.f32.mrb[0].mxu0
        %v1111 = vpop.f32.mrb[0].mxu0
        %v1112 = vadd.f32 %v848, %v1111
        %v1113 = vpop.f32.mrb[0].mxu0
        %1114 = vmatprep.mubr.bf16.mxu0 0
        %1115 = vmatmul.mubr.bf16.gmra.mrb[0].mxu0 %v818
        %v1116 = vpop.f32.mrb[0].mxu0
        %v1117 = vadd.f32 %v848, %v1116
        %v1118 = vpop.f32.mrb[0].mxu0
        %v1119 = vpop.f32.mrb[0].mxu0
        %v1120 = vadd.f32 %v848, %v1119
        %v1121 = vpop.f32.mrb[0].mxu0
        %1122 = vmatprep.mubr.bf16.mxu0 0
        %1123 = vmatmul.mubr.bf16.gmra.mrb[0].mxu0 %v819
        %v1124 = vpop.f32.mrb[0].mxu0
        %v1125 = vadd.f32 %v848, %v1124
        %v1126 = vpop.f32.mrb[0].mxu0
        %v1127 = vpop.f32.mrb[0].mxu0
        %v1128 = vadd.f32 %v848, %v1127
        %v1129 = vpop.f32.mrb[0].mxu0
        %1130 = vmatprep.mubr.bf16.mxu0 0
        %1131 = vmatmul.mubr.bf16.gmra.mrb[0].mxu0 %v820
        %v1132 = vpop.f32.mrb[0].mxu0
        %v1133 = vadd.f32 %v848, %v1132
        %v1134 = vpop.f32.mrb[0].mxu0
        %v1135 = vpop.f32.mrb[0].mxu0
        %v1136 = vadd.f32 %v848, %v1135
        %v1137 = vpop.f32.mrb[0].mxu0
        %1138 = vmatprep.mubr.bf16.mxu0 0
        %1139 = vmatmul.mubr.bf16.gmra.mrb[0].mxu0 %v821
        %v1140 = vpop.f32.mrb[0].mxu0
        %v1141 = vadd.f32 %v848, %v1140
        %v1142 = vpop.f32.mrb[0].mxu0
        %v1143 = vpop.f32.mrb[0].mxu0
        %v1144 = vadd.f32 %v848, %v1143
        %v1145 = vpop.f32.mrb[0].mxu0
        %1146 = vmatprep.mubr.bf16.mxu0 0
        %1147 = vmatmul.mubr.bf16.gmra.mrb[0].mxu0 %v822
        %v1148 = vpop.f32.mrb[0].mxu0
        %v1149 = vadd.f32 %v848, %v1148
        %v1150 = vpop.f32.mrb[0].mxu0
        %v1151 = vpop.f32.mrb[0].mxu0
        %v1152 = vadd.f32 %v848, %v1151
        %v1153 = vpop.f32.mrb[0].mxu0
        %1154 = vmatprep.mubr.bf16.mxu0 0
        %1155 = vmatmul.mubr.bf16.gmra.mrb[0].mxu0 %v823
        %v1156 = vpop.f32.mrb[0].mxu0
        %v1157 = vadd.f32 %v848, %v1156
        %v1158 = vpop.f32.mrb[0].mxu0
        %v1159 = vpop.f32.mrb[0].mxu0
        %v1160 = vadd.f32 %v848, %v1159
        %v1161 = vpop.f32.mrb[0].mxu0
        %1162 = vmatprep.mubr.bf16.mxu0 0
        %1163 = vmatmul.mubr.bf16.gmra.mrb[0].mxu0 %v824
        %v1164 = vpop.f32.mrb[0].mxu0
        %v1165 = vadd.f32 %v848, %v1164
        %v1166 = vpop.f32.mrb[0].mxu0
        %v1167 = vpop.f32.mrb[0].mxu0
        %v1168 = vadd.f32 %v848, %v1167
        %v1169 = vpop.f32.mrb[0].mxu0
        %1170 = vmatprep.mubr.bf16.mxu0 0
        %1171 = vmatmul.mubr.bf16.gmra.mrb[0].mxu0 %v825
        %v1172 = vpop.f32.mrb[0].mxu0
        %v1173 = vadd.f32 %v848, %v1172
        %v1174 = vpop.f32.mrb[0].mxu0
        %v1175 = vpop.f32.mrb[0].mxu0
        %v1176 = vadd.f32 %v848, %v1175
        %v1177 = vpop.f32.mrb[0].mxu0
        %1178 = vmatprep.mubr.bf16.mxu0 0
        %1179 = vmatmul.mubr.bf16.gmra.mrb[0].mxu0 %v826
        %v1180 = vpop.f32.mrb[0].mxu0
        %v1181 = vadd.f32 %v848, %v1180
        %v1182 = vpop.f32.mrb[0].mxu0
        %v1183 = vpop.f32.mrb[0].mxu0
        %v1184 = vadd.f32 %v848, %v1183
        %v1185 = vpop.f32.mrb[0].mxu0
        %1186 = vdwg.mxu0
        %v1187 = vmax.f32 %v933, 0.0
        %v1188 = vmax.f32 %v936, 0.0
        %v1189 = vmax.f32 %v941, 0.0
        %v1190 = vmax.f32 %v944, 0.0
        %v1191 = vmax.f32 %v949, 0.0
        %v1192 = vmax.f32 %v952, 0.0
        %v1193 = vmax.f32 %v957, 0.0
        %v1194 = vmax.f32 %v960, 0.0
        %v1195 = vmax.f32 %v965, 0.0
        %v1196 = vmax.f32 %v968, 0.0
        %v1197 = vmax.f32 %v973, 0.0
        %v1198 = vmax.f32 %v976, 0.0
        %v1199 = vmax.f32 %v981, 0.0
        %v1200 = vmax.f32 %v984, 0.0
        %v1201 = vmax.f32 %v989, 0.0
        %v1202 = vmax.f32 %v992, 0.0
        %v1203 = vmax.f32 %v997, 0.0
        %v1204 = vmax.f32 %v1000, 0.0
        %v1205 = vmax.f32 %v1005, 0.0
        %v1206 = vmax.f32 %v1008, 0.0
        %v1207 = vmax.f32 %v1013, 0.0
        %v1208 = vmax.f32 %v1016, 0.0
        %v1209 = vmax.f32 %v1021, 0.0
        %v1210 = vmax.f32 %v1024, 0.0
        %v1211 = vmax.f32 %v1029, 0.0
        %v1212 = vmax.f32 %v1032, 0.0
        %v1213 = vmax.f32 %v1037, 0.0
        %v1214 = vmax.f32 %v1040, 0.0
        %v1215 = vmax.f32 %v1045, 0.0
        %v1216 = vmax.f32 %v1048, 0.0
        %v1217 = vmax.f32 %v1053, 0.0
        %v1218 = vmax.f32 %v1056, 0.0
        %v1219 = vmax.f32 %v1061, 0.0
        %v1220 = vmax.f32 %v1064, 0.0
        %v1221 = vmax.f32 %v1069, 0.0
        %v1222 = vmax.f32 %v1072, 0.0
        %v1223 = vmax.f32 %v1077, 0.0
        %v1224 = vmax.f32 %v1080, 0.0
        %v1225 = vmax.f32 %v1085, 0.0
        %v1226 = vmax.f32 %v1088, 0.0
        %v1227 = vmax.f32 %v1093, 0.0
        %v1228 = vmax.f32 %v1096, 0.0
        %v1229 = vmax.f32 %v1101, 0.0
        %v1230 = vmax.f32 %v1104, 0.0
        %v1231 = vmax.f32 %v1109, 0.0
        %v1232 = vmax.f32 %v1112, 0.0
        %v1233 = vmax.f32 %v1117, 0.0
        %v1234 = vmax.f32 %v1120, 0.0
        %v1235 = vmax.f32 %v1125, 0.0
        %v1236 = vmax.f32 %v1128, 0.0
        %v1237 = vmax.f32 %v1133, 0.0
        %v1238 = vmax.f32 %v1136, 0.0
        %v1239 = vmax.f32 %v1141, 0.0
        %v1240 = vmax.f32 %v1144, 0.0
        %v1241 = vmax.f32 %v1149, 0.0
        %v1242 = vmax.f32 %v1152, 0.0
        %v1243 = vmax.f32 %v1157, 0.0
        %v1244 = vmax.f32 %v1160, 0.0
        %v1245 = vmax.f32 %v1165, 0.0
        %v1246 = vmax.f32 %v1168, 0.0
        %v1247 = vmax.f32 %v1173, 0.0
        %v1248 = vmax.f32 %v1176, 0.0
        %v1249 = vmax.f32 %v1181, 0.0
        %v1250 = vmax.f32 %v1184, 0.0
        %v1251 = vadd.f32 %v1187, %v275
        %v1252 = vadd.f32 %v1188, %v276
        %v1253 = vadd.f32 %v1189, %v277
        %v1254 = vadd.f32 %v1190, %v278
        %v1255 = vadd.f32 %v1191, %v279
        %v1256 = vadd.f32 %v1192, %v280
        %v1257 = vadd.f32 %v1193, %v281
        %v1258 = vadd.f32 %v1194, %v282
        %v1259 = vadd.f32 %v1195, %v283
        %v1260 = vadd.f32 %v1196, %v284
        %v1261 = vadd.f32 %v1197, %v285
        %v1262 = vadd.f32 %v1198, %v286
        %v1263 = vadd.f32 %v1199, %v287
        %v1264 = vadd.f32 %v1200, %v288
        %v1265 = vadd.f32 %v1201, %v289
        %v1266 = vadd.f32 %v1202, %v290
        %v1267 = vadd.f32 %v1203, %v291
        %v1268 = vadd.f32 %v1204, %v292
        %v1269 = vadd.f32 %v1205, %v293
        %v1270 = vadd.f32 %v1206, %v294
        %v1271 = vadd.f32 %v1207, %v295
        %v1272 = vadd.f32 %v1208, %v296
        %v1273 = vadd.f32 %v1209, %v297
        %v1274 = vadd.f32 %v1210, %v298
        %v1275 = vadd.f32 %v1211, %v299
        %v1276 = vadd.f32 %v1212, %v300
        %v1277 = vadd.f32 %v1213, %v301
        %v1278 = vadd.f32 %v1214, %v302
        %v1279 = vadd.f32 %v1215, %v303
        %v1280 = vadd.f32 %v1216, %v304
        %v1281 = vadd.f32 %v1217, %v305
        %v1282 = vadd.f32 %v1218, %v306
        %v1283 = vadd.f32 %v1219, %v307
        %v1284 = vadd.f32 %v1220, %v308
        %v1285 = vadd.f32 %v1221, %v309
        %v1286 = vadd.f32 %v1222, %v310
        %v1287 = vadd.f32 %v1223, %v311
        %v1288 = vadd.f32 %v1224, %v312
        %v1289 = vadd.f32 %v1225, %v313
        %v1290 = vadd.f32 %v1226, %v314
        %v1291 = vadd.f32 %v1227, %v315
        %v1292 = vadd.f32 %v1228, %v316
        %v1293 = vadd.f32 %v1229, %v317
        %v1294 = vadd.f32 %v1230, %v318
        %v1295 = vadd.f32 %v1231, %v319
        %v1296 = vadd.f32 %v1232, %v320
        %v1297 = vadd.f32 %v1233, %v321
        %v1298 = vadd.f32 %v1234, %v322
        %v1299 = vadd.f32 %v1235, %v323
        %v1300 = vadd.f32 %v1236, %v324
        %v1301 = vadd.f32 %v1237, %v325
        %v1302 = vadd.f32 %v1238, %v326
        %v1303 = vadd.f32 %v1239, %v327
        %v1304 = vadd.f32 %v1240, %v328
        %v1305 = vadd.f32 %v1241, %v329
        %v1306 = vadd.f32 %v1242, %v330
        %v1307 = vadd.f32 %v1243, %v331
        %v1308 = vadd.f32 %v1244, %v332
        %v1309 = vadd.f32 %v1245, %v333
        %v1310 = vadd.f32 %v1246, %v334
        %v1311 = vadd.f32 %v1247, %v335
        %v1312 = vadd.f32 %v1248, %v336
        %v1313 = vadd.f32 %v1249, %v337
        %v1314 = vadd.f32 %v1250, %v338
        %1315 = vst [vmem:[%s271] sm:$0xff] %v1251
        %1316 = vst [vmem:[%s271 + $0x8] sm:$0xff] %v1252
        %1317 = vst [vmem:[%s271 + $0x10] sm:$0xff] %v1253
        %1318 = vst [vmem:[%s271 + $0x18] sm:$0xff] %v1254
        %1319 = vst [vmem:[%s271 + $0x20] sm:$0xff] %v1255
        %1320 = vst [vmem:[%s271 + $0x28] sm:$0xff] %v1256
        %1321 = vst [vmem:[%s271 + $0x30] sm:$0xff] %v1257
        %1322 = vst [vmem:[%s271 + $0x38] sm:$0xff] %v1258
        %1323 = vst [vmem:[%s271 + $0x40] sm:$0xff] %v1259
        %1324 = vst [vmem:[%s271 + $0x48] sm:$0xff] %v1260
        %1325 = vst [vmem:[%s271 + $0x50] sm:$0xff] %v1261
        %1326 = vst [vmem:[%s271 + $0x58] sm:$0xff] %v1262
        %1327 = vst [vmem:[%s271 + $0x60] sm:$0xff] %v1263
        %1328 = vst [vmem:[%s271 + $0x68] sm:$0xff] %v1264
        %1329 = vst [vmem:[%s271 + $0x70] sm:$0xff] %v1265
        %1330 = vst [vmem:[%s271 + $0x78] sm:$0xff] %v1266
        %1331 = vst [vmem:[%s271 + $0x80] sm:$0xff] %v1267
        %1332 = vst [vmem:[%s271 + $0x88] sm:$0xff] %v1268
        %1333 = vst [vmem:[%s271 + $0x90] sm:$0xff] %v1269
        %1334 = vst [vmem:[%s271 + $0x98] sm:$0xff] %v1270
        %1335 = vst [vmem:[%s271 + $0xa0] sm:$0xff] %v1271
        %1336 = vst [vmem:[%s271 + $0xa8] sm:$0xff] %v1272
        %1337 = vst [vmem:[%s271 + $0xb0] sm:$0xff] %v1273
        %1338 = vst [vmem:[%s271 + $0xb8] sm:$0xff] %v1274
        %1339 = vst [vmem:[%s271 + $0xc0] sm:$0xff] %v1275
        %1340 = vst [vmem:[%s271 + $0xc8] sm:$0xff] %v1276
        %1341 = vst [vmem:[%s271 + $0xd0] sm:$0xff] %v1277
        %1342 = vst [vmem:[%s271 + $0xd8] sm:$0xff] %v1278
        %1343 = vst [vmem:[%s271 + $0xe0] sm:$0xff] %v1279
        %1344 = vst [vmem:[%s271 + $0xe8] sm:$0xff] %v1280
        %1345 = vst [vmem:[%s271 + $0xf0] sm:$0xff] %v1281
        %1346 = vst [vmem:[%s271 + $0xf8] sm:$0xff] %v1282
        %1347 = vst [vmem:[%s271 + $0x100] sm:$0xff] %v1283
        %1348 = vst [vmem:[%s271 + $0x108] sm:$0xff] %v1284
        %1349 = vst [vmem:[%s271 + $0x110] sm:$0xff] %v1285
        %1350 = vst [vmem:[%s271 + $0x118] sm:$0xff] %v1286
        %1351 = vst [vmem:[%s271 + $0x120] sm:$0xff] %v1287
        %1352 = vst [vmem:[%s271 + $0x128] sm:$0xff] %v1288
        %1353 = vst [vmem:[%s271 + $0x130] sm:$0xff] %v1289
        %1354 = vst [vmem:[%s271 + $0x138] sm:$0xff] %v1290
        %1355 = vst [vmem:[%s271 + $0x140] sm:$0xff] %v1291
        %1356 = vst [vmem:[%s271 + $0x148] sm:$0xff] %v1292
        %1357 = vst [vmem:[%s271 + $0x150] sm:$0xff] %v1293
        %1358 = vst [vmem:[%s271 + $0x158] sm:$0xff] %v1294
        %1359 = vst [vmem:[%s271 + $0x160] sm:$0xff] %v1295
        %1360 = vst [vmem:[%s271 + $0x168] sm:$0xff] %v1296
        %1361 = vst [vmem:[%s271 + $0x170] sm:$0xff] %v1297
        %1362 = vst [vmem:[%s271 + $0x178] sm:$0xff] %v1298
        %1363 = vst [vmem:[%s271 + $0x180] sm:$0xff] %v1299
        %1364 = vst [vmem:[%s271 + $0x188] sm:$0xff] %v1300
        %1365 = vst [vmem:[%s271 + $0x190] sm:$0xff] %v1301
        %1366 = vst [vmem:[%s271 + $0x198] sm:$0xff] %v1302
        %1367 = vst [vmem:[%s271 + $0x1a0] sm:$0xff] %v1303
        %1368 = vst [vmem:[%s271 + $0x1a8] sm:$0xff] %v1304
        %1369 = vst [vmem:[%s271 + $0x1b0] sm:$0xff] %v1305
        %1370 = vst [vmem:[%s271 + $0x1b8] sm:$0xff] %v1306
        %1371 = vst [vmem:[%s271 + $0x1c0] sm:$0xff] %v1307
        %1372 = vst [vmem:[%s271 + $0x1c8] sm:$0xff] %v1308
        %1373 = vst [vmem:[%s271 + $0x1d0] sm:$0xff] %v1309
        %1374 = vst [vmem:[%s271 + $0x1d8] sm:$0xff] %v1310
        %1375 = vst [vmem:[%s271 + $0x1e0] sm:$0xff] %v1311
        %1376 = vst [vmem:[%s271 + $0x1e8] sm:$0xff] %v1312
        %1377 = vst [vmem:[%s271 + $0x1f0] sm:$0xff] %v1313
        %1378 = vst [vmem:[%s271 + $0x1f8] sm:$0xff] %v1314
        %s1379 = sand.u32 %s141, 1
        %s1380 = scalar_lea.sflag [#allocation4], %s1379
        %s1381 = sand.u32 %s141, 1
        %s1382 = smul.addr %s1381, 512
        %s1383 = scalar_lea.vmem [#allocation8], %s1382
        // Predicated region
        $region53: #{tpu_custom_call.1} parent=39 // pred_check
          %p1384 = pneg %p151
        $region54: #{tpu_custom_call.1} parent=39 // pred_check_branch
          %1386 = sbr.rel (%p1384) target = $region56
        $region55: #{tpu_custom_call.1} parent=39 // pred_region
          %s1387 = smul.u32 64, %s23
          %s1389 = ssub.s32 8192, 8192
          %1390 = vsyncadd %s1380, %s1389
          %s1391 = smul.addr %s1387, 128
          %s1392 = scalar_lea.hbm %s5, %s1391
          %s1393 = sshll.u32 %s1383, 4
          %s1394 = int_to_ptr.vmem [resolvable:$true] %s1393
          %1399 = dma.vmem_to_hbm [thread:$0]  %s1394, 8192, %s1392, %s1380, 128, 128, 8
        $region56: #{tpu_custom_call.1} parent=39 // pred_fallthru
          _
      $region40: #{tpu_custom_call.1} parent=5 // pred_fallthru
        _
      %p1400 = scmp.le.s32.totalorder 2, %s18
      // Predicated region
      $region57: #{tpu_custom_call.1} parent=5 // pred_check
        %p1401 = pneg %p1400
      $region58: #{tpu_custom_call.1} parent=5 // pred_check_branch
        %1403 = sbr.rel (%p1401) target = $region60
      $region59: #{tpu_custom_call.1} parent=5 // pred_region
        %s1404 = ssub.s32 %s18, 2
        // Predicated region
        $region61: #{tpu_custom_call.1} parent=59 // pred_check
          %p1405 = pneg %p157
        $region62: #{tpu_custom_call.1} parent=59 // pred_check_branch
          %1407 = sbr.rel (%p1405) target = $region64
        $region63: #{tpu_custom_call.1} parent=59 // pred_region
          %s1408 = sand.u32 %s142, 1
          %s1409 = scalar_lea.sflag [#allocation4], %s1408
          %s1410 = sand.u32 %s142, 1
          %s1411 = smul.addr %s1410, 512
          %s1412 = scalar_lea.vmem [#allocation8], %s1411
          %1413 = dma.done %s1409, 8192
        $region64: #{tpu_custom_call.1} parent=59 // pred_fallthru
          _
      $region60: #{tpu_custom_call.1} parent=5 // pred_fallthru
        _
    $region6: #{tpu_custom_call.1} parent=1 // loop_footer
      %s22 = sadd.s32 1, %s18
    $region7: #{tpu_custom_call.1} parent=1 // loop_footer_branch
      %17 = sbr.rel target = $region3
    $region8: #{tpu_custom_call.1} parent=1 // loop_exit
      _
    %1414 = vsyncpa [#allocation3], 1
    %s1415 = scalar_lea.sflag [#allocation3], 1
    %1416 = vsyncpa %s1415, 1
    %1417 = vsyncpa [#allocation6], 1
    %1418 = vsyncpa [#allocation4], 1
    %s1419 = scalar_lea.sflag [#allocation4], 1
    %1420 = vsyncpa %s1419, 1

</llo_original>
